<compile_context>
chip_gen: v6e
topology: v6e:2x2x1
jax: 0.10.0
libtpu: 0.0.40
codegen_flags: <defaults>
</compile_context>

<pallas_src>
import functools

import jax
import jax.numpy as jnp
from jax import lax
from jax.experimental import pallas as pl
from jax.experimental.pallas import tpu as pltpu


# ----------------------------- configuration --------------------------------
N_EMBED_SECT = 16
N_HIDDEN = (32, 32)
N_LATENT = 8
ENTITY_VOCAB = 32
RELATION_VOCAB = 16
BATCH = 8

N_EMBED = N_EMBED_SECT * 3                                      # 48
ENC_DIMS = [N_EMBED] + list(N_HIDDEN) + [2 * N_LATENT]          # [48, 32, 32, 16]
DEC_DIMS = [N_LATENT] + list(N_HIDDEN)[::-1] + [N_EMBED]        # [8, 32, 32, 48]
PH1 = max((N_EMBED + ENTITY_VOCAB) // 2, 2 * N_EMBED)           # 96
PHR = max((N_EMBED + RELATION_VOCAB) // 2, 2 * N_EMBED)         # 96
PH2 = max((N_EMBED + ENTITY_VOCAB) // 2, 2 * N_EMBED)           # 96

PROJ2_K = PH1 + PHR + PH2                                       # 288
PROJ2_N = ENTITY_VOCAB + RELATION_VOCAB + ENTITY_VOCAB          # 80
OH_WIDTH = ENTITY_VOCAB + RELATION_VOCAB + ENTITY_VOCAB         # 80 (one-hot width)


def _round8(v):
    return (v + 7) // 8 * 8


# --- main weight slab (bf16), one 128-lane tile wide --------------------------
_MAIN_LAYERS = [
    ("enc0", ENC_DIMS[0], ENC_DIMS[1]),
    ("enc1", ENC_DIMS[1], ENC_DIMS[2]),
    ("enc2", ENC_DIMS[2], ENC_DIMS[3]),
    ("dec1", DEC_DIMS[1], DEC_DIMS[2]),
    ("dec2", DEC_DIMS[2], DEC_DIMS[3]),
    ("proj2", PROJ2_K, PROJ2_N),        # block-diag [p1_w1, pr_w1, p2_w1]
]
W_OFFSETS = {}
_r = 0
for _name, _k, _n in _MAIN_LAYERS:
    W_OFFSETS[_name] = (_r, _k, _n)
    _r += _round8(_k)
W_ROWS = _r                             # 464 (all offsets are 16-row aligned)
W_COLS = 128                            # widest main-slab layer is 80

# --- zmrg + bias slab (f32), 416 lanes wide ----------------------------------
# Rows 0..7: merged "consumes z" weights [dec_w0 | pad | p1_w0 | pr_w0 | p2_w0],
# laid out so BOTH downstream slices start on 128-lane boundaries:
#   cols   0.. 31 : decoder hidden        cols 128..223 : projector-ent1 hidden
#   cols  32..127 : zero padding          cols 224..319 : projector-rel  hidden
#                                         cols 320..415 : projector-ent2 hidden
# Row 8: zmrg bias (same layout); rows 9..14: per-layer biases; row 15: pad.
ZC_DEC = 0
ZC_P1 = 128
ZC_PR = ZC_P1 + PH1                     # 224
ZC_P2 = ZC_PR + PHR                     # 320
ZB_COLS = ZC_P2 + PH2                   # 416
ZB_ROWS = 16
BIAS_ROW = {"zmrg": 8, "enc0": 9, "enc1": 10, "enc2": 11,
            "dec1": 12, "dec2": 13, "proj2": 14}

# --- lane-aligned fused output slab -------------------------------------------
# Every logical segment starts on a 128-lane boundary, so each in-kernel store
# keeps its data in natural lane positions (no cross-lane shuffles).
OUT_X = 0 * 128        # x        (48 wide)
OUT_XHAT = 1 * 128     # x_hat    (48 wide)
OUT_ENC = 2 * 128      # [mu|logvar] (16 wide)
OUT_LOGITS = 3 * 128   # [le1|lr|le2] (80 wide)
OUT_PROBS = 4 * 128    # [pe1|pr|pe2] (80 wide)
OUT_COLS = 5 * 128     # 640


# ------------------------------- the kernel ----------------------------------
def _vae_kernel(idx_ref, eps_ref, emb_ref, w_ref, zb_ref, out_ref):
    f32 = jnp.float32
    bm = out_ref.shape[0]

    def layer(h, name, act):
        r0, k, n = W_OFFSETS[name]
        w = w_ref[pl.ds(r0, k), pl.ds(0, n)].astype(f32)      # bf16 -> f32 in-VMEM
        b = zb_ref[pl.ds(BIAS_ROW[name], 1), pl.ds(0, n)]     # (1, n) f32
        y = jnp.dot(h, w, preferred_element_type=f32) + b
        return jnp.maximum(y, 0.0) if act else y

    # ----- embedding gather fused in-kernel as a one-hot matmul -----
    ids = idx_ref[...]                                        # (bm, 3) int32
    col = lax.broadcasted_iota(jnp.int32, (bm, OH_WIDTH), 1)
    onehot = ((col == ids[:, 0:1])
              | (col == ids[:, 1:2] + ENTITY_VOCAB)
              | (col == ids[:, 2:3] + (ENTITY_VOCAB + RELATION_VOCAB))).astype(f32)
    x = jnp.dot(onehot, emb_ref[...], preferred_element_type=f32)   # (bm, 48)

    # ----- encoder: Linear+ReLU, Linear+ReLU, Linear -> 2*n_latent -----
    h = layer(x, "enc0", act=True)
    h = layer(h, "enc1", act=True)
    enc = layer(h, "enc2", act=False)                         # (bm, 16) = [mu|logvar]
    mu = enc[:, :N_LATENT]
    logvar = enc[:, N_LATENT:]

    # ----- reparameterize (kept in f32): z = mu + eps * exp(0.5*logvar) -----
    z = mu + eps_ref[...] * jnp.exp(0.5 * logvar)             # (bm, 8)

    # ----- merged "consumes z" layer: decoder-0 + three projector hiddens -----
    wz = zb_ref[pl.ds(0, N_LATENT), :]                        # (8, 416) f32
    bz = zb_ref[pl.ds(BIAS_ROW["zmrg"], 1), :]                # (1, 416)
    hz = jnp.dot(z, wz, preferred_element_type=f32) + bz      # (bm, 416)
    d = jnp.maximum(hz[:, ZC_DEC:ZC_DEC + DEC_DIMS[1]], 0.0)  # lanes 0..31 (ReLU)
    hp = hz[:, ZC_P1:ZB_COLS]                                 # lanes 128.. (tile-aligned)

    # ----- decoder tail: (Linear+ReLU) x 2 -----
    d = layer(d, "dec1", act=True)
    x_hat = layer(d, "dec2", act=True)                        # (bm, 48)

    # ----- merged projector second layer (block-diagonal) -----
    logits = layer(hp, "proj2", act=False)                    # (bm, 80) = [le1|lr|le2]

    # ----- segmented softmax over the single 80-wide logits block -----
    col80 = lax.broadcasted_iota(jnp.int32, (bm, PROJ2_N), 1)
    s1 = col80 < ENTITY_VOCAB
    s2 = (col80 >= ENTITY_VOCAB) & (col80 < ENTITY_VOCAB + RELATION_VOCAB)

    def seg_reduce(fn, v, fill):
        r1 = fn(jnp.where(s1, v, fill), axis=-1, keepdims=True)
        r2 = fn(jnp.where(s2, v, fill), axis=-1, keepdims=True)
        r3 = fn(jnp.where(s1 | s2, fill, v), axis=-1, keepdims=True)
        return jnp.where(s1, r1, jnp.where(s2, r2, r3))

    mx = seg_reduce(jnp.max, logits, jnp.float32(-1e30))
    e = jnp.exp(logits - mx)
    den = seg_reduce(jnp.sum, e, jnp.float32(0.0))
    # exact reciprocal so the downstream 1e-5 row-sum check holds
    probs = e * pl.reciprocal(den, approx=False)              # (bm, 80)

    # ----- lane-aligned per-segment stores (no concatenates) -----
    out_ref[...] = jnp.zeros_like(out_ref)
    out_ref[:, OUT_X:OUT_X + N_EMBED] = x
    out_ref[:, OUT_XHAT:OUT_XHAT + N_EMBED] = x_hat
    out_ref[:, OUT_ENC:OUT_ENC + 2 * N_LATENT] = enc
    out_ref[:, OUT_LOGITS:OUT_LOGITS + PROJ2_N] = logits
    out_ref[:, OUT_PROBS:OUT_PROBS + PROJ2_N] = probs


# ------------------------------ the wrapper -----------------------------------
@functools.partial(jax.jit, static_argnames=("noise_factor",))
def part_rot_symmetric_vae_forward(packed, idx_ent1, idx_rel, idx_ent2,
                                   eps_key, noise_factor: float = 1.0):
    """Returns (x, x_hat, logits_tuple, probs_tuple, mu, logvar)."""
    B = idx_ent1.shape[0]
    ids = jnp.stack([idx_ent1, idx_rel, idx_ent2], axis=-1).astype(jnp.int32)  # (B, 3)
    eps = jax.random.normal(eps_key, (B, N_LATENT), jnp.float32) * noise_factor
    # TODO(synk): eps could be drawn in-kernel via pltpu.prng_seed /
    # pltpu.stateful_normal to drop one more wrapper dispatch.

    # Batch tile: cap at 128 rows and split the batch so the "parallel" grid
    # axis actually shards across both TensorCores on v7x (>=2 programs once
    # B >= 16); BM is always a multiple of 8 and B is padded up to grid*BM,
    # so the working set stays bounded regardless of batch size.
    BM = min(128, _round8(-(-B // 2)))
    grid_n = -(-B // BM)
    B_pad = grid_n * BM
    if B_pad != B:
        ids = jnp.pad(ids, ((0, B_pad - B), (0, 0)))
        eps = jnp.pad(eps, ((0, B_pad - B), (0, 0)))

    slab = pl.pallas_call(
        _vae_kernel,
        out_shape=jax.ShapeDtypeStruct((B_pad, OUT_COLS), jnp.float32),
        grid=(grid_n,),
        in_specs=[
            pl.BlockSpec((BM, 3), lambda i: (i, 0)),
            pl.BlockSpec((BM, N_LATENT), lambda i: (i, 0)),
            # Constant operands: whole-array resident in VMEM (single copy,
            # no per-grid-step DMA, no dead second buffer).
            pl.BlockSpec(memory_space=pltpu.MemorySpace.VMEM),   # embed block-diag
            pl.BlockSpec(memory_space=pltpu.MemorySpace.VMEM),   # bf16 weight slab
            pl.BlockSpec(memory_space=pltpu.MemorySpace.VMEM),   # zmrg + bias slab
        ],
        out_specs=pl.BlockSpec((BM, OUT_COLS), lambda i: (i, 0)),
        compiler_params=pltpu.CompilerParams(
            dimension_semantics=("parallel",)),
    )(ids, eps, packed["embed"], packed["W"], packed["zb"])

    slab = slab[:B]
    # The 6-way output tuple forces these final splits; they are thin slices of
    # lane-aligned tiles and fuse into the consumers.
    x = slab[:, OUT_X:OUT_X + N_EMBED]
    x_hat = slab[:, OUT_XHAT:OUT_XHAT + N_EMBED]
    mu = slab[:, OUT_ENC:OUT_ENC + N_LATENT]
    logvar = slab[:, OUT_ENC + N_LATENT:OUT_ENC + 2 * N_LATENT]
    le1 = slab[:, OUT_LOGITS:OUT_LOGITS + ENTITY_VOCAB]
    lr = slab[:, OUT_LOGITS + ENTITY_VOCAB:OUT_LOGITS + ENTITY_VOCAB + RELATION_VOCAB]
    le2 = slab[:, OUT_LOGITS + ENTITY_VOCAB + RELATION_VOCAB:OUT_LOGITS + PROJ2_N]
    pe1 = slab[:, OUT_PROBS:OUT_PROBS + ENTITY_VOCAB]
    pr = slab[:, OUT_PROBS + ENTITY_VOCAB:OUT_PROBS + ENTITY_VOCAB + RELATION_VOCAB]
    pe2 = slab[:, OUT_PROBS + ENTITY_VOCAB + RELATION_VOCAB:OUT_PROBS + PROJ2_N]

    return (x, x_hat, (le1, lr, le2), (pe1, pr, pe2), mu, logvar)


# --------------------------- deterministic init --------------------------------
def _kaiming_uniform(key, fan_in, fan_out):
    # Matches nn.init.kaiming_uniform_(w): bound = sqrt(6 / fan_in); stored
    # transposed as (in, out).  Round-tripped through bf16 so the packed bf16
    # weight slab and the f32 reference use numerically identical parameters.
    bound = (6.0 / fan_in) ** 0.5
    w = jax.random.uniform(key, (fan_in, fan_out), jnp.float32, -bound, bound)
    return w.astype(jnp.bfloat16).astype(jnp.float32)


def init_raw_params(key):
    ks = iter(jax.random.split(key, 24))
    p = {}
    # nn.Embedding default init: N(0, 1)
    p["entity_embed"] = jax.random.normal(next(ks), (ENTITY_VOCAB, N_EMBED_SECT), jnp.float32)
    p["relation_embed"] = jax.random.normal(next(ks), (RELATION_VOCAB, N_EMBED_SECT), jnp.float32)

    def lin(prefix, i, fi, fo):
        p[f"{prefix}_w{i}"] = _kaiming_uniform(next(ks), fi, fo)
        p[f"{prefix}_b{i}"] = jnp.zeros((fo,), jnp.float32)

    for i in range(len(ENC_DIMS) - 1):
        lin("enc", i, ENC_DIMS[i], ENC_DIMS[i + 1])
    for i in range(len(DEC_DIMS) - 1):
        lin("dec", i, DEC_DIMS[i], DEC_DIMS[i + 1])
    for name, hid, vocab in (("p1", PH1, ENTITY_VOCAB),
                             ("pr", PHR, RELATION_VOCAB),
                             ("p2", PH2, ENTITY_VOCAB)):
        p[f"{name}_w0"] = _kaiming_uniform(next(ks), N_LATENT, hid)
        p[f"{name}_b0"] = jnp.zeros((hid,), jnp.float32)
        p[f"{name}_w1"] = _kaiming_uniform(next(ks), hid, vocab)
        p[f"{name}_b1"] = jnp.zeros((vocab,), jnp.float32)
    return p


def pack_params(raw):
    """One-time packing (outside the jitted hot path):
       * (464, 128) bf16 main weight slab (enc, decoder tail, block-diag proj2)
       * (16, 416) f32 slab: merged 'consumes z' weights + all bias rows
       * (80, 48) f32 block-diagonal embedding matrix for the in-kernel
         one-hot gather matmul."""
    W = jnp.zeros((W_ROWS, W_COLS), jnp.float32)
    zb = jnp.zeros((ZB_ROWS, ZB_COLS), jnp.float32)

    def put_w(W, name, w_mat):
        r0, k, n = W_OFFSETS[name]
        return W.at[r0:r0 + k, 0:n].set(w_mat)

    def put_b(zb, name, b_vec):
        return zb.at[BIAS_ROW[name], 0:b_vec.shape[0]].set(b_vec)

    W = put_w(W, "enc0", raw["enc_w0"]); zb = put_b(zb, "enc0", raw["enc_b0"])
    W = put_w(W, "enc1", raw["enc_w1"]); zb = put_b(zb, "enc1", raw["enc_b1"])
    W = put_w(W, "enc2", raw["enc_w2"]); zb = put_b(zb, "enc2", raw["enc_b2"])
    W = put_w(W, "dec1", raw["dec_w1"]); zb = put_b(zb, "dec1", raw["dec_b1"])
    W = put_w(W, "dec2", raw["dec_w2"]); zb = put_b(zb, "dec2", raw["dec_b2"])

    # block-diagonal merged projector second layer
    w_p2 = jnp.zeros((PROJ2_K, PROJ2_N), jnp.float32)
    w_p2 = w_p2.at[0:PH1, 0:ENTITY_VOCAB].set(raw["p1_w1"])
    w_p2 = w_p2.at[PH1:PH1 + PHR,
                   ENTITY_VOCAB:ENTITY_VOCAB + RELATION_VOCAB].set(raw["pr_w1"])
    w_p2 = w_p2.at[PH1 + PHR:PROJ2_K,
                   ENTITY_VOCAB + RELATION_VOCAB:PROJ2_N].set(raw["p2_w1"])
    b_p2 = jnp.concatenate([raw["p1_b1"], raw["pr_b1"], raw["p2_b1"]])
    W = put_w(W, "proj2", w_p2); zb = put_b(zb, "proj2", b_p2)

    # merged "consumes z" layer (rows 0..7 weights, row 8 bias), lane-aligned
    zr = BIAS_ROW["zmrg"]
    zb = zb.at[0:N_LATENT, ZC_DEC:ZC_DEC + DEC_DIMS[1]].set(raw["dec_w0"])
    zb = zb.at[0:N_LATENT, ZC_P1:ZC_P1 + PH1].set(raw["p1_w0"])
    zb = zb.at[0:N_LATENT, ZC_PR:ZC_PR + PHR].set(raw["pr_w0"])
    zb = zb.at[0:N_LATENT, ZC_P2:ZC_P2 + PH2].set(raw["p2_w0"])
    zb = zb.at[zr, ZC_DEC:ZC_DEC + DEC_DIMS[1]].set(raw["dec_b0"])
    zb = zb.at[zr, ZC_P1:ZC_P1 + PH1].set(raw["p1_b0"])
    zb = zb.at[zr, ZC_PR:ZC_PR + PHR].set(raw["pr_b0"])
    zb = zb.at[zr, ZC_P2:ZC_P2 + PH2].set(raw["p2_b0"])

    # block-diagonal embedding matrix for the fused one-hot gather matmul
    E = jnp.zeros((OH_WIDTH, N_EMBED), jnp.float32)
    E = E.at[0:ENTITY_VOCAB, 0:N_EMBED_SECT].set(raw["entity_embed"])
    E = E.at[ENTITY_VOCAB:ENTITY_VOCAB + RELATION_VOCAB,
             N_EMBED_SECT:2 * N_EMBED_SECT].set(raw["relation_embed"])
    E = E.at[ENTITY_VOCAB + RELATION_VOCAB:OH_WIDTH,
             2 * N_EMBED_SECT:N_EMBED].set(raw["entity_embed"])

    return {"embed": E, "W": W.astype(jnp.bfloat16), "zb": zb}


# -------------------------- pure-JAX reference ---------------------------------
def reference_forward(raw, idx_ent1, idx_rel, idx_ent2, eps):
    relu = jax.nn.relu
    x = jnp.concatenate([raw["entity_embed"][idx_ent1],
                         raw["relation_embed"][idx_rel],
                         raw["entity_embed"][idx_ent2]], axis=-1).astype(jnp.float32)
    h = relu(x @ raw["enc_w0"] + raw["enc_b0"])
    h = relu(h @ raw["enc_w1"] + raw["enc_b1"])
    enc = h @ raw["enc_w2"] + raw["enc_b2"]
    mu, logvar = enc[:, :N_LATENT], enc[:, N_LATENT:]
    z = mu + eps * jnp.exp(0.5 * logvar)
    d = relu(z @ raw["dec_w0"] + raw["dec_b0"])
    d = relu(d @ raw["dec_w1"] + raw["dec_b1"])
    x_hat = relu(d @ raw["dec_w2"] + raw["dec_b2"])
    le1 = (z @ raw["p1_w0"] + raw["p1_b0"]) @ raw["p1_w1"] + raw["p1_b1"]
    lr = (z @ raw["pr_w0"] + raw["pr_b0"]) @ raw["pr_w1"] + raw["pr_b1"]
    le2 = (z @ raw["p2_w0"] + raw["p2_b0"]) @ raw["p2_w1"] + raw["p2_b1"]
    sm = jax.nn.softmax
    return (x, x_hat, (le1, lr, le2),
            (sm(le1, -1), sm(lr, -1), sm(le2, -1)), mu, logvar)


# ---------------------------------- main ---------------------------------------
if __name__ == "__main__":
    root = jax.random.PRNGKey(0)
    k_param, k_e1, k_rel, k_e2, k_eps = jax.random.split(root, 5)

    raw = init_raw_params(k_param)
    packed = pack_params(raw)

    idx_ent1 = jax.random.randint(k_e1, (BATCH,), 0, ENTITY_VOCAB, jnp.int32)
    idx_rel = jax.random.randint(k_rel, (BATCH,), 0, RELATION_VOCAB, jnp.int32)
    idx_ent2 = jax.random.randint(k_e2, (BATCH,), 0, ENTITY_VOCAB, jnp.int32)

    out = part_rot_symmetric_vae_forward(
        packed, idx_ent1, idx_rel, idx_ent2, k_eps, noise_factor=1.0)
    jax.block_until_ready(out)

    x, x_hat, (le1, lr, le2), (pe1, pr, pe2), mu, logvar = out

    # shape checks
    assert x.shape == (BATCH, N_EMBED) and x_hat.shape == (BATCH, N_EMBED)
    assert le1.shape == (BATCH, ENTITY_VOCAB) and le2.shape == (BATCH, ENTITY_VOCAB)
    assert lr.shape == (BATCH, RELATION_VOCAB)
    assert pe1.shape == (BATCH, ENTITY_VOCAB) and pe2.shape == (BATCH, ENTITY_VOCAB)
    assert pr.shape == (BATCH, RELATION_VOCAB)
    assert mu.shape == (BATCH, N_LATENT) and logvar.shape == (BATCH, N_LATENT)

    # softmax rows sum to 1 (exact reciprocal used in-kernel)
    assert jnp.allclose(jnp.sum(pe1, axis=-1), 1.0, atol=1e-5)
    assert jnp.allclose(jnp.sum(pr, axis=-1), 1.0, atol=1e-5)
    assert jnp.allclose(jnp.sum(pe2, axis=-1), 1.0, atol=1e-5)

    # compare against pure-JAX reference (same bf16-representable weights, so
    # only MXU-vs-XLA f32 accumulation differs)
    eps = jax.random.normal(k_eps, (BATCH, N_LATENT), jnp.float32) * 1.0
    (rx, rxhat, (rle1, rlr, rle2), (rpe1, rpr, rpe2), rmu, rlogvar) = \
        reference_forward(raw, idx_ent1, idx_rel, idx_ent2, eps)
    tol = dict(atol=5e-2, rtol=5e-2)
    assert jnp.allclose(x, rx, **tol)
    assert jnp.allclose(x_hat, rxhat, **tol)
    assert jnp.allclose(mu, rmu, **tol) and jnp.allclose(logvar, rlogvar, **tol)
    assert jnp.allclose(le1, rle1, **tol)
    assert jnp.allclose(lr, rlr, **tol)
    assert jnp.allclose(le2, rle2, **tol)
    assert jnp.allclose(pe1, rpe1, atol=1e-2)
    assert jnp.allclose(pr, rpr, atol=1e-2)
    assert jnp.allclose(pe2, rpe2, atol=1e-2)

    print("KERNEL_OK")
</pallas_src>

<mosaic_0001>
module attributes {stable_mosaic.version = 11 : i64} {
  func.func @_vae_kernel(%arg0: i32, %arg1: memref<8x3xi32, #tpu.memory_space<vmem>>, %arg2: memref<8x8xf32, #tpu.memory_space<vmem>>, %arg3: memref<80x48xf32, #tpu.memory_space<vmem>>, %arg4: memref<464x128xbf16, #tpu.memory_space<vmem>>, %arg5: memref<16x416xf32, #tpu.memory_space<vmem>>, %arg6: memref<8x640xf32, #tpu.memory_space<vmem>>) attributes {dimension_semantics = [#tpu.dimension_semantics<parallel>], iteration_bounds = array<i64: 1>, scalar_prefetch = 0 : i64, scratch_operands = 0 : i64, tpu.core_type = #tpu.core_type<tc>, window_params = [{transform_indices = @transform_0, window_bounds = array<i64: 8, 3>}, {transform_indices = @transform_1, window_bounds = array<i64: 8, 8>}, {pipeline_mode = #tpu.pipeline_mode<synchronous>, transform_indices = @transform_2, window_bounds = array<i64: 80, 48>}, {pipeline_mode = #tpu.pipeline_mode<synchronous>, transform_indices = @transform_3, window_bounds = array<i64: 464, 128>}, {pipeline_mode = #tpu.pipeline_mode<synchronous>, transform_indices = @transform_4, window_bounds = array<i64: 16, 416>}, {transform_indices = @transform_5, window_bounds = array<i64: 8, 640>}]} {
    %c0 = arith.constant 0 : index
    %c0_0 = arith.constant 0 : index
    %0 = vector.load %arg1[%c0, %c0_0] : memref<8x3xi32, #tpu.memory_space<vmem>>, vector<8x3xi32>
    %1 = tpu.iota {dimensions = array<i32: 1>} : vector<8x80xi32>
    %2 = vector.extract_strided_slice %0 {offsets = [0, 0], sizes = [8, 1], strides = [1, 1]} : vector<8x3xi32> to vector<8x1xi32>
    %3 = vector.broadcast %2 : vector<8x1xi32> to vector<8x80xi32>
    %4 = arith.cmpi eq, %1, %3 : vector<8x80xi32>
    %5 = vector.extract_strided_slice %0 {offsets = [0, 1], sizes = [8, 1], strides = [1, 1]} : vector<8x3xi32> to vector<8x1xi32>
    %c32_i32 = arith.constant 32 : i32
    %6 = vector.broadcast %c32_i32 : i32 to vector<8x1xi32>
    %7 = arith.addi %5, %6 : vector<8x1xi32>
    %8 = vector.broadcast %7 : vector<8x1xi32> to vector<8x80xi32>
    %9 = arith.cmpi eq, %1, %8 : vector<8x80xi32>
    %10 = arith.ori %4, %9 : vector<8x80xi1>
    %11 = vector.extract_strided_slice %0 {offsets = [0, 2], sizes = [8, 1], strides = [1, 1]} : vector<8x3xi32> to vector<8x1xi32>
    %c48_i32 = arith.constant 48 : i32
    %12 = vector.broadcast %c48_i32 : i32 to vector<8x1xi32>
    %13 = arith.addi %11, %12 : vector<8x1xi32>
    %14 = vector.broadcast %13 : vector<8x1xi32> to vector<8x80xi32>
    %15 = arith.cmpi eq, %1, %14 : vector<8x80xi32>
    %16 = arith.ori %10, %15 : vector<8x80xi1>
    %17 = arith.extui %16 : vector<8x80xi1> to vector<8x80xi32>
    %18 = arith.sitofp %17 : vector<8x80xi32> to vector<8x80xf32>
    %c0_1 = arith.constant 0 : index
    %c0_2 = arith.constant 0 : index
    %19 = vector.load %arg3[%c0_1, %c0_2] : memref<80x48xf32, #tpu.memory_space<vmem>>, vector<80x48xf32>
    %cst = arith.constant dense<0.000000e+00> : vector<8x48xf32>
    %20 = tpu.matmul %18, %19, %cst {dimension_numbers = #tpu.dot_dimension_numbers<[1], [0], [0], [1], [0, 0, 1, 1], [], []>} : vector<8x80xf32>, vector<80x48xf32>, vector<8x48xf32> -> vector<8x48xf32>
    %c0_3 = arith.constant 0 : index
    %c0_4 = arith.constant 0 : index
    %21 = vector.load %arg4[%c0_3, %c0_4] : memref<464x128xbf16, #tpu.memory_space<vmem>>, vector<48x32xbf16>
    %22 = arith.extf %21 : vector<48x32xbf16> to vector<48x32xf32>
    %c9 = arith.constant 9 : index
    %c0_5 = arith.constant 0 : index
    %23 = vector.load %arg5[%c9, %c0_5] : memref<16x416xf32, #tpu.memory_space<vmem>>, vector<1x32xf32>
    %cst_6 = arith.constant dense<0.000000e+00> : vector<8x32xf32>
    %24 = tpu.matmul %20, %22, %cst_6 {dimension_numbers = #tpu.dot_dimension_numbers<[1], [0], [0], [1], [0, 0, 1, 1], [], []>} : vector<8x48xf32>, vector<48x32xf32>, vector<8x32xf32> -> vector<8x32xf32>
    %25 = vector.broadcast %23 : vector<1x32xf32> to vector<8x32xf32>
    %26 = arith.addf %24, %25 : vector<8x32xf32>
    %cst_7 = arith.constant 0.000000e+00 : f32
    %27 = vector.broadcast %cst_7 : f32 to vector<8x32xf32>
    %28 = arith.maximumf %26, %27 : vector<8x32xf32>
    %c48 = arith.constant 48 : index
    %c0_8 = arith.constant 0 : index
    %29 = vector.load %arg4[%c48, %c0_8] : memref<464x128xbf16, #tpu.memory_space<vmem>>, vector<32x32xbf16>
    %30 = arith.extf %29 : vector<32x32xbf16> to vector<32x32xf32>
    %c10 = arith.constant 10 : index
    %c0_9 = arith.constant 0 : index
    %31 = vector.load %arg5[%c10, %c0_9] : memref<16x416xf32, #tpu.memory_space<vmem>>, vector<1x32xf32>
    %cst_10 = arith.constant dense<0.000000e+00> : vector<8x32xf32>
    %32 = tpu.matmul %28, %30, %cst_10 {dimension_numbers = #tpu.dot_dimension_numbers<[1], [0], [0], [1], [0, 0, 1, 1], [], []>} : vector<8x32xf32>, vector<32x32xf32>, vector<8x32xf32> -> vector<8x32xf32>
    %33 = vector.broadcast %31 : vector<1x32xf32> to vector<8x32xf32>
    %34 = arith.addf %32, %33 : vector<8x32xf32>
    %cst_11 = arith.constant 0.000000e+00 : f32
    %35 = vector.broadcast %cst_11 : f32 to vector<8x32xf32>
    %36 = arith.maximumf %34, %35 : vector<8x32xf32>
    %c80 = arith.constant 80 : index
    %c0_12 = arith.constant 0 : index
    %37 = vector.load %arg4[%c80, %c0_12] : memref<464x128xbf16, #tpu.memory_space<vmem>>, vector<32x16xbf16>
    %38 = arith.extf %37 : vector<32x16xbf16> to vector<32x16xf32>
    %c11 = arith.constant 11 : index
    %c0_13 = arith.constant 0 : index
    %39 = vector.load %arg5[%c11, %c0_13] : memref<16x416xf32, #tpu.memory_space<vmem>>, vector<1x16xf32>
    %cst_14 = arith.constant dense<0.000000e+00> : vector<8x16xf32>
    %40 = tpu.matmul %36, %38, %cst_14 {dimension_numbers = #tpu.dot_dimension_numbers<[1], [0], [0], [1], [0, 0, 1, 1], [], []>} : vector<8x32xf32>, vector<32x16xf32>, vector<8x16xf32> -> vector<8x16xf32>
    %41 = vector.broadcast %39 : vector<1x16xf32> to vector<8x16xf32>
    %42 = arith.addf %40, %41 : vector<8x16xf32>
    %43 = vector.extract_strided_slice %42 {offsets = [0, 0], sizes = [8, 8], strides = [1, 1]} : vector<8x16xf32> to vector<8x8xf32>
    %44 = vector.extract_strided_slice %42 {offsets = [0, 8], sizes = [8, 8], strides = [1, 1]} : vector<8x16xf32> to vector<8x8xf32>
    %c0_15 = arith.constant 0 : index
    %c0_16 = arith.constant 0 : index
    %45 = vector.load %arg2[%c0_15, %c0_16] : memref<8x8xf32, #tpu.memory_space<vmem>>, vector<8x8xf32>
    %cst_17 = arith.constant 5.000000e-01 : f32
    %46 = vector.broadcast %cst_17 : f32 to vector<8x8xf32>
    %47 = arith.mulf %46, %44 : vector<8x8xf32>
    %48 = math.exp %47 : vector<8x8xf32>
    %49 = arith.mulf %45, %48 : vector<8x8xf32>
    %50 = arith.addf %43, %49 : vector<8x8xf32>
    %c0_18 = arith.constant 0 : index
    %c0_19 = arith.constant 0 : index
    %51 = vector.load %arg5[%c0_18, %c0_19] : memref<16x416xf32, #tpu.memory_space<vmem>>, vector<8x416xf32>
    %c8 = arith.constant 8 : index
    %c0_20 = arith.constant 0 : index
    %52 = vector.load %arg5[%c8, %c0_20] : memref<16x416xf32, #tpu.memory_space<vmem>>, vector<1x416xf32>
    %cst_21 = arith.constant dense<0.000000e+00> : vector<8x416xf32>
    %53 = tpu.matmul %50, %51, %cst_21 {dimension_numbers = #tpu.dot_dimension_numbers<[1], [0], [0], [1], [0, 0, 1, 1], [], []>} : vector<8x8xf32>, vector<8x416xf32>, vector<8x416xf32> -> vector<8x416xf32>
    %54 = vector.broadcast %52 : vector<1x416xf32> to vector<8x416xf32>
    %55 = arith.addf %53, %54 : vector<8x416xf32>
    %56 = vector.extract_strided_slice %55 {offsets = [0, 0], sizes = [8, 32], strides = [1, 1]} : vector<8x416xf32> to vector<8x32xf32>
    %cst_22 = arith.constant 0.000000e+00 : f32
    %57 = vector.broadcast %cst_22 : f32 to vector<8x32xf32>
    %58 = arith.maximumf %56, %57 : vector<8x32xf32>
    %59 = vector.extract_strided_slice %55 {offsets = [0, 128], sizes = [8, 288], strides = [1, 1]} : vector<8x416xf32> to vector<8x288xf32>
    %c112 = arith.constant 112 : index
    %c0_23 = arith.constant 0 : index
    %60 = vector.load %arg4[%c112, %c0_23] : memref<464x128xbf16, #tpu.memory_space<vmem>>, vector<32x32xbf16>
    %61 = arith.extf %60 : vector<32x32xbf16> to vector<32x32xf32>
    %c12 = arith.constant 12 : index
    %c0_24 = arith.constant 0 : index
    %62 = vector.load %arg5[%c12, %c0_24] : memref<16x416xf32, #tpu.memory_space<vmem>>, vector<1x32xf32>
    %cst_25 = arith.constant dense<0.000000e+00> : vector<8x32xf32>
    %63 = tpu.matmul %58, %61, %cst_25 {dimension_numbers = #tpu.dot_dimension_numbers<[1], [0], [0], [1], [0, 0, 1, 1], [], []>} : vector<8x32xf32>, vector<32x32xf32>, vector<8x32xf32> -> vector<8x32xf32>
    %64 = vector.broadcast %62 : vector<1x32xf32> to vector<8x32xf32>
    %65 = arith.addf %63, %64 : vector<8x32xf32>
    %cst_26 = arith.constant 0.000000e+00 : f32
    %66 = vector.broadcast %cst_26 : f32 to vector<8x32xf32>
    %67 = arith.maximumf %65, %66 : vector<8x32xf32>
    %c144 = arith.constant 144 : index
    %c0_27 = arith.constant 0 : index
    %68 = vector.load %arg4[%c144, %c0_27] : memref<464x128xbf16, #tpu.memory_space<vmem>>, vector<32x48xbf16>
    %69 = arith.extf %68 : vector<32x48xbf16> to vector<32x48xf32>
    %c13 = arith.constant 13 : index
    %c0_28 = arith.constant 0 : index
    %70 = vector.load %arg5[%c13, %c0_28] : memref<16x416xf32, #tpu.memory_space<vmem>>, vector<1x48xf32>
    %cst_29 = arith.constant dense<0.000000e+00> : vector<8x48xf32>
    %71 = tpu.matmul %67, %69, %cst_29 {dimension_numbers = #tpu.dot_dimension_numbers<[1], [0], [0], [1], [0, 0, 1, 1], [], []>} : vector<8x32xf32>, vector<32x48xf32>, vector<8x48xf32> -> vector<8x48xf32>
    %72 = vector.broadcast %70 : vector<1x48xf32> to vector<8x48xf32>
    %73 = arith.addf %71, %72 : vector<8x48xf32>
    %cst_30 = arith.constant 0.000000e+00 : f32
    %74 = vector.broadcast %cst_30 : f32 to vector<8x48xf32>
    %75 = arith.maximumf %73, %74 : vector<8x48xf32>
    %c176 = arith.constant 176 : index
    %c0_31 = arith.constant 0 : index
    %76 = vector.load %arg4[%c176, %c0_31] : memref<464x128xbf16, #tpu.memory_space<vmem>>, vector<288x80xbf16>
    %77 = arith.extf %76 : vector<288x80xbf16> to vector<288x80xf32>
    %c14 = arith.constant 14 : index
    %c0_32 = arith.constant 0 : index
    %78 = vector.load %arg5[%c14, %c0_32] : memref<16x416xf32, #tpu.memory_space<vmem>>, vector<1x80xf32>
    %cst_33 = arith.constant dense<0.000000e+00> : vector<8x80xf32>
    %79 = tpu.matmul %59, %77, %cst_33 {dimension_numbers = #tpu.dot_dimension_numbers<[1], [0], [0], [1], [0, 0, 1, 1], [], []>} : vector<8x288xf32>, vector<288x80xf32>, vector<8x80xf32> -> vector<8x80xf32>
    %80 = vector.broadcast %78 : vector<1x80xf32> to vector<8x80xf32>
    %81 = arith.addf %79, %80 : vector<8x80xf32>
    %82 = tpu.iota {dimensions = array<i32: 1>} : vector<8x80xi32>
    %c32_i32_34 = arith.constant 32 : i32
    %83 = vector.broadcast %c32_i32_34 : i32 to vector<8x80xi32>
    %84 = arith.cmpi slt, %82, %83 : vector<8x80xi32>
    %c32_i32_35 = arith.constant 32 : i32
    %85 = vector.broadcast %c32_i32_35 : i32 to vector<8x80xi32>
    %86 = arith.cmpi sge, %82, %85 : vector<8x80xi32>
    %c48_i32_36 = arith.constant 48 : i32
    %87 = vector.broadcast %c48_i32_36 : i32 to vector<8x80xi32>
    %88 = arith.cmpi slt, %82, %87 : vector<8x80xi32>
    %89 = arith.andi %86, %88 : vector<8x80xi1>
    %cst_37 = arith.constant -1.000000e+30 : f32
    %90 = vector.broadcast %cst_37 : f32 to vector<8x80xf32>
    %91 = arith.select %84, %81, %90 : vector<8x80xi1>, vector<8x80xf32>
    %cst_38 = arith.constant dense<0xFF800000> : vector<8xf32>
    %92 = vector.multi_reduction <maximumf>, %91, %cst_38 [1] : vector<8x80xf32> to vector<8xf32>
    %93 = vector.shape_cast %92 : vector<8xf32> to vector<8x1xf32>
    %cst_39 = arith.constant -1.000000e+30 : f32
    %94 = vector.broadcast %cst_39 : f32 to vector<8x80xf32>
    %95 = arith.select %89, %81, %94 : vector<8x80xi1>, vector<8x80xf32>
    %cst_40 = arith.constant dense<0xFF800000> : vector<8xf32>
    %96 = vector.multi_reduction <maximumf>, %95, %cst_40 [1] : vector<8x80xf32> to vector<8xf32>
    %97 = vector.shape_cast %96 : vector<8xf32> to vector<8x1xf32>
    %98 = arith.ori %84, %89 : vector<8x80xi1>
    %cst_41 = arith.constant -1.000000e+30 : f32
    %99 = vector.broadcast %cst_41 : f32 to vector<8x80xf32>
    %100 = arith.select %98, %99, %81 : vector<8x80xi1>, vector<8x80xf32>
    %cst_42 = arith.constant dense<0xFF800000> : vector<8xf32>
    %101 = vector.multi_reduction <maximumf>, %100, %cst_42 [1] : vector<8x80xf32> to vector<8xf32>
    %102 = vector.shape_cast %101 : vector<8xf32> to vector<8x1xf32>
    %103 = vector.shape_cast %97 : vector<8x1xf32> to vector<8x1xf32>
    %104 = vector.broadcast %103 : vector<8x1xf32> to vector<8x80xf32>
    %105 = vector.shape_cast %102 : vector<8x1xf32> to vector<8x1xf32>
    %106 = vector.broadcast %105 : vector<8x1xf32> to vector<8x80xf32>
    %107 = arith.select %89, %104, %106 : vector<8x80xi1>, vector<8x80xf32>
    %108 = vector.shape_cast %93 : vector<8x1xf32> to vector<8x1xf32>
    %109 = vector.broadcast %108 : vector<8x1xf32> to vector<8x80xf32>
    %110 = arith.select %84, %109, %107 : vector<8x80xi1>, vector<8x80xf32>
    %111 = arith.subf %81, %110 : vector<8x80xf32>
    %112 = math.exp %111 : vector<8x80xf32>
    %cst_43 = arith.constant 0.000000e+00 : f32
    %113 = vector.broadcast %cst_43 : f32 to vector<8x80xf32>
    %114 = arith.select %84, %112, %113 : vector<8x80xi1>, vector<8x80xf32>
    %cst_44 = arith.constant dense<0.000000e+00> : vector<8xf32>
    %115 = vector.multi_reduction <add>, %114, %cst_44 [1] : vector<8x80xf32> to vector<8xf32>
    %116 = vector.shape_cast %115 : vector<8xf32> to vector<8x1xf32>
    %cst_45 = arith.constant 0.000000e+00 : f32
    %117 = vector.broadcast %cst_45 : f32 to vector<8x80xf32>
    %118 = arith.select %89, %112, %117 : vector<8x80xi1>, vector<8x80xf32>
    %cst_46 = arith.constant dense<0.000000e+00> : vector<8xf32>
    %119 = vector.multi_reduction <add>, %118, %cst_46 [1] : vector<8x80xf32> to vector<8xf32>
    %120 = vector.shape_cast %119 : vector<8xf32> to vector<8x1xf32>
    %121 = arith.ori %84, %89 : vector<8x80xi1>
    %cst_47 = arith.constant 0.000000e+00 : f32
    %122 = vector.broadcast %cst_47 : f32 to vector<8x80xf32>
    %123 = arith.select %121, %122, %112 : vector<8x80xi1>, vector<8x80xf32>
    %cst_48 = arith.constant dense<0.000000e+00> : vector<8xf32>
    %124 = vector.multi_reduction <add>, %123, %cst_48 [1] : vector<8x80xf32> to vector<8xf32>
    %125 = vector.shape_cast %124 : vector<8xf32> to vector<8x1xf32>
    %126 = vector.shape_cast %120 : vector<8x1xf32> to vector<8x1xf32>
    %127 = vector.broadcast %126 : vector<8x1xf32> to vector<8x80xf32>
    %128 = vector.shape_cast %125 : vector<8x1xf32> to vector<8x1xf32>
    %129 = vector.broadcast %128 : vector<8x1xf32> to vector<8x80xf32>
    %130 = arith.select %89, %127, %129 : vector<8x80xi1>, vector<8x80xf32>
    %131 = vector.shape_cast %116 : vector<8x1xf32> to vector<8x1xf32>
    %132 = vector.broadcast %131 : vector<8x1xf32> to vector<8x80xf32>
    %133 = arith.select %84, %132, %130 : vector<8x80xi1>, vector<8x80xf32>
    %134 = tpu.reciprocal %133 : vector<8x80xf32> -> vector<8x80xf32>
    %135 = arith.mulf %112, %134 : vector<8x80xf32>
    %cst_49 = arith.constant 0.000000e+00 : f32
    %136 = vector.broadcast %cst_49 : f32 to vector<8x640xf32>
    %c0_50 = arith.constant 0 : index
    %c0_51 = arith.constant 0 : index
    %137 = vector.load %arg6[%c0_50, %c0_51] : memref<8x640xf32, #tpu.memory_space<vmem>>, vector<8x640xf32>
    tpu.vector_store %arg6[%c0_50, %c0_51], %136 {strides = array<i32>} : memref<8x640xf32, #tpu.memory_space<vmem>>, vector<8x640xf32>,
    %c0_52 = arith.constant 0 : index
    %c0_53 = arith.constant 0 : index
    %138 = vector.load %arg6[%c0_52, %c0_53] : memref<8x640xf32, #tpu.memory_space<vmem>>, vector<8x48xf32>
    tpu.vector_store %arg6[%c0_52, %c0_53], %20 {strides = array<i32>} : memref<8x640xf32, #tpu.memory_space<vmem>>, vector<8x48xf32>,
    %c0_54 = arith.constant 0 : index
    %c128 = arith.constant 128 : index
    %139 = vector.load %arg6[%c0_54, %c128] : memref<8x640xf32, #tpu.memory_space<vmem>>, vector<8x48xf32>
    tpu.vector_store %arg6[%c0_54, %c128], %75 {strides = array<i32>} : memref<8x640xf32, #tpu.memory_space<vmem>>, vector<8x48xf32>,
    %c0_55 = arith.constant 0 : index
    %c256 = arith.constant 256 : index
    %140 = vector.load %arg6[%c0_55, %c256] : memref<8x640xf32, #tpu.memory_space<vmem>>, vector<8x16xf32>
    tpu.vector_store %arg6[%c0_55, %c256], %42 {strides = array<i32>} : memref<8x640xf32, #tpu.memory_space<vmem>>, vector<8x16xf32>,
    %c0_56 = arith.constant 0 : index
    %c384 = arith.constant 384 : index
    %141 = vector.load %arg6[%c0_56, %c384] : memref<8x640xf32, #tpu.memory_space<vmem>>, vector<8x80xf32>
    tpu.vector_store %arg6[%c0_56, %c384], %81 {strides = array<i32>} : memref<8x640xf32, #tpu.memory_space<vmem>>, vector<8x80xf32>,
    %c0_57 = arith.constant 0 : index
    %c512 = arith.constant 512 : index
    %142 = vector.load %arg6[%c0_57, %c512] : memref<8x640xf32, #tpu.memory_space<vmem>>, vector<8x80xf32>
    tpu.vector_store %arg6[%c0_57, %c512], %135 {strides = array<i32>} : memref<8x640xf32, #tpu.memory_space<vmem>>, vector<8x80xf32>,
    return
  }
  func.func @transform_0(%arg0: i32) -> (i32, i32) {
    %c0_i32 = arith.constant 0 : i32
    %c0_i32_0 = arith.constant 0 : i32
    return %arg0, %c0_i32 : i32, i32
  }
  func.func @transform_1(%arg0: i32) -> (i32, i32) {
    %c0_i32 = arith.constant 0 : i32
    %c0_i32_0 = arith.constant 0 : i32
    return %arg0, %c0_i32 : i32, i32
  }
  func.func @transform_2(%arg0: i32) -> (i32, i32) {
    %c0_i32 = arith.constant 0 : i32
    %c0_i32_0 = arith.constant 0 : i32
    %c0_i32_1 = arith.constant 0 : i32
    return %c0_i32, %c0_i32_0 : i32, i32
  }
  func.func @transform_3(%arg0: i32) -> (i32, i32) {
    %c0_i32 = arith.constant 0 : i32
    %c0_i32_0 = arith.constant 0 : i32
    %c0_i32_1 = arith.constant 0 : i32
    return %c0_i32, %c0_i32_0 : i32, i32
  }
  func.func @transform_4(%arg0: i32) -> (i32, i32) {
    %c0_i32 = arith.constant 0 : i32
    %c0_i32_0 = arith.constant 0 : i32
    %c0_i32_1 = arith.constant 0 : i32
    return %c0_i32, %c0_i32_0 : i32, i32
  }
  func.func @transform_5(%arg0: i32) -> (i32, i32) {
    %c0_i32 = arith.constant 0 : i32
    %c0_i32_0 = arith.constant 0 : i32
    return %arg0, %c0_i32 : i32, i32
  }
}

</mosaic_0001>

<llo_original>
// kernel: part_rot_symmetric_vae_forward.1
$region0: #{part_rot_symmetric_vae_forward.1}
  #allocation0 [shape = 'u32[]', space=smem, size = 0x4, offset = 0x4, fixed_abs, tag = 'smem constant byte address 0x4 - core index']
  #allocation1 [shape = 'u32[144,128]{1,0:T(1,128)}', space=vmem, size = 0x12000, scoped, tag = 'internal scratch']
  %s0 = inlined_call_operand.vmem [shape: s32[8,3], index: 0, kind: input, shape index: {}]
  %s1 = inlined_call_operand.vmem [shape: f32[8,8], index: 1, kind: input, shape index: {}]
  %s2 = inlined_call_operand.vmem [shape: f32[80,48], index: 2, kind: input, shape index: {}]
  %s3 = inlined_call_operand.vmem [shape: bf16[464,128], index: 3, kind: input, shape index: {}]
  %s4 = inlined_call_operand.hbm [shape: f32[16,416], index: 4, kind: input, shape index: {}]
  %s5 = inlined_call_operand.vmem [shape: f32[8,640], index: 5, kind: output, shape index: {}]
  %s6 = sld [smem:[#allocation0]]
  $region34: #{part_rot_symmetric_vae_forward.1} parent=0
    _
  %s8 = ssub.s32 1, %s6
  %s9 = scalar_select 0, %s8, %s6
  $region1: #{part_rot_symmetric_vae_forward.1} parent=0
    #allocation2 [shape = 'u8[32768]{0}', space=vmem, size = 0x8000, scoped, tag = 'input window, operand 4, single buffered']
    #allocation3 [shape = 's32[1]{0}', space=sflag, size = 0x4, scoped, tag = 'scoped memory for part_rot_symmetric_vae_forward.1']
    %10 = vsyncpa [#allocation3], 0
    // Predicated region
    $region2: #{part_rot_symmetric_vae_forward.1} parent=1 // pred_check
      _
    $region3: #{part_rot_symmetric_vae_forward.1} parent=1 // pred_check_branch
      %12 = sbr.rel (0) target = $region5
    $region4: #{part_rot_symmetric_vae_forward.1} parent=1 // pred_region
      _
    $region5: #{part_rot_symmetric_vae_forward.1} parent=1 // pred_fallthru
      _
    // Predicated region
    $region6: #{part_rot_symmetric_vae_forward.1} parent=1 // pred_check
      _
    $region7: #{part_rot_symmetric_vae_forward.1} parent=1 // pred_check_branch
      %14 = sbr.rel (0) target = $region9
    $region8: #{part_rot_symmetric_vae_forward.1} parent=1 // pred_region
      _
    $region9: #{part_rot_symmetric_vae_forward.1} parent=1 // pred_fallthru
      _
    // Predicated region
    $region10: #{part_rot_symmetric_vae_forward.1} parent=1 // pred_check
      _
    $region11: #{part_rot_symmetric_vae_forward.1} parent=1 // pred_check_branch
      %16 = sbr.rel (0) target = $region13
    $region12: #{part_rot_symmetric_vae_forward.1} parent=1 // pred_region
      _
    $region13: #{part_rot_symmetric_vae_forward.1} parent=1 // pred_fallthru
      _
    // Predicated region
    $region14: #{part_rot_symmetric_vae_forward.1} parent=1 // pred_check
      _
    $region15: #{part_rot_symmetric_vae_forward.1} parent=1 // pred_check_branch
      %18 = sbr.rel (0) target = $region17
    $region16: #{part_rot_symmetric_vae_forward.1} parent=1 // pred_region
      _
    $region17: #{part_rot_symmetric_vae_forward.1} parent=1 // pred_fallthru
      _
    // Predicated region
    $region18: #{part_rot_symmetric_vae_forward.1} parent=1 // pred_check
      _
    $region19: #{part_rot_symmetric_vae_forward.1} parent=1 // pred_check_branch
      %20 = sbr.rel (0) target = $region21
    $region20: #{part_rot_symmetric_vae_forward.1} parent=1 // pred_region
      %s22 = ssub.s32 1024, 1024
      %23 = vsyncadd [#allocation3], %s22
      %s24 = sshll.u32 [#allocation2], 4
      %s25 = int_to_ptr.vmem [resolvable:$true] %s24
      %30 = dma.hbm_to_vmem [thread:$0]  %s4, 1024, %s25, [#allocation3], 512, 512, 32
    $region21: #{part_rot_symmetric_vae_forward.1} parent=1 // pred_fallthru
      _
    // Predicated region
    $region22: #{part_rot_symmetric_vae_forward.1} parent=1 // pred_check
      _
    $region23: #{part_rot_symmetric_vae_forward.1} parent=1 // pred_check_branch
      %32 = sbr.rel (0) target = $region25
    $region24: #{part_rot_symmetric_vae_forward.1} parent=1 // pred_region
      %33 = dma.done [#allocation3], 1024
    $region25: #{part_rot_symmetric_vae_forward.1} parent=1 // pred_fallthru
      _
    %v34 = vld [vmem:[%s0] sm:$0xff]
    %v35 = vlaneseq
    %v36 = vand.u32 %v35, 127
    %37 = vset.pattern.permute.xlu0 0
    %38 = vperm.xlu0 %37, %v34
    %v39 = vpop.permute.xlu0 %38
    %vm40 = vcmp.eq.s32.totalorder %v36, %v39
    %v41 = vadd.s32 %v34, 32
    %42 = vset.pattern.permute.xlu0 1
    %43 = vperm.xlu0 %42, %v41
    %v44 = vpop.permute.xlu0 %43
    %vm45 = vcmp.eq.s32.totalorder %v36, %v44
    %vm46 = vmor %vm40, %vm45
    %v47 = vadd.s32 %v34, 48
    %48 = vset.pattern.permute.xlu0 2
    %49 = vperm.xlu0 %48, %v47
    %v50 = vpop.permute.xlu0 %49
    %vm51 = vcmp.eq.s32.totalorder %v36, %v50
    %vm52 = vmor %vm46, %vm51
    %v53 = vsel %vm52, 1, 0
    %v54 = vcvt.s32.f32 %v53
    %v55 = vld [vmem:[%s2] sm:$0xff]
    %v56 = vld [vmem:[%s2 + $0x8] sm:$0xff]
    %v57 = vld [vmem:[%s2 + $0x10] sm:$0xff]
    %v58 = vld [vmem:[%s2 + $0x18] sm:$0xff]
    %v59 = vld [vmem:[%s2 + $0x20] sm:$0xff]
    %v60 = vld [vmem:[%s2 + $0x28] sm:$0xff]
    %v61 = vld [vmem:[%s2 + $0x30] sm:$0xff]
    %v62 = vld [vmem:[%s2 + $0x38] sm:$0xff]
    %v63 = vld [vmem:[%s2 + $0x40] sm:$0xff]
    %v64 = vld [vmem:[%s2 + $0x48] sm:$0xff]
    %vm65 = vcmask 654336
    %v67 = vsel %vm65, %v54, 0
    %69 = vmatprep.subr.mxu0 0.0
    %70 = vmatpush1.msra.mxu0 0.0
    %71 = vmatprep.subr.mxu0 0.0
    %72 = vmatpush1.msra.mxu0 0.0
    %73 = vmatprep.subr.mxu0 0.0
    %74 = vmatpush1.msra.mxu0 0.0
    %75 = vmatprep.subr.mxu0 0.0
    %76 = vmatpush1.msra.mxu0 0.0
    %77 = vmatprep.subr.mxu0 0.0
    %78 = vmatpush1.msra.mxu0 0.0
    %79 = vmatprep.subr.mxu0 0.0
    %80 = vmatpush1.msra.mxu0 0.0
    %81 = vmatprep.subr.mxu0 0.0
    %82 = vmatpush1.msra.mxu0 %v64
    %83 = vmatprep.subr.mxu0 0.0
    %84 = vmatpush1.msra.mxu0 %v63
    %85 = vmatprep.subr.mxu0 0.0
    %86 = vmatpush1.msra.mxu0 %v62
    %87 = vmatprep.subr.mxu0 0.0
    %88 = vmatpush1.msra.mxu0 %v61
    %89 = vmatprep.subr.mxu0 0.0
    %90 = vmatpush1.msra.mxu0 %v60
    %91 = vmatprep.subr.mxu0 0.0
    %92 = vmatpush1.msra.mxu0 %v59
    %93 = vmatprep.subr.mxu0 0.0
    %94 = vmatpush1.msra.mxu0 %v58
    %95 = vmatprep.subr.mxu0 0.0
    %96 = vmatpush1.msra.mxu0 %v57
    %97 = vmatprep.subr.mxu0 0.0
    %98 = vmatpush1.msra.mxu0 %v56
    %99 = vmatprep.subr.mxu0 0.0
    %100 = vmatpush1.msra.mxu0 %v55
    %101 = vmatprep.subr.mxu0 0.0
    %102 = vmatpush2.msra.mxu0 0.0
    %103 = vmatprep.subr.mxu0 0.0
    %104 = vmatpush2.msra.mxu0 0.0
    %105 = vmatprep.subr.mxu0 0.0
    %106 = vmatpush2.msra.mxu0 0.0
    %107 = vmatprep.subr.mxu0 0.0
    %108 = vmatpush2.msra.mxu0 0.0
    %109 = vmatprep.subr.mxu0 0.0
    %110 = vmatpush2.msra.mxu0 0.0
    %111 = vmatprep.subr.mxu0 0.0
    %112 = vmatpush2.msra.mxu0 0.0
    %113 = vmatprep.subr.mxu0 0.0
    %114 = vmatpush2.msra.mxu0 0.0
    %115 = vmatprep.subr.mxu0 0.0
    %116 = vmatpush2.msra.mxu0 0.0
    %117 = vmatprep.subr.mxu0 0.0
    %118 = vmatpush2.msra.mxu0 0.0
    %119 = vmatprep.subr.mxu0 0.0
    %120 = vmatpush2.msra.mxu0 0.0
    %121 = vmatprep.subr.mxu0 0.0
    %122 = vmatpush2.msra.mxu0 0.0
    %123 = vmatprep.subr.mxu0 0.0
    %124 = vmatpush2.msra.mxu0 0.0
    %125 = vmatprep.subr.mxu0 0.0
    %126 = vmatpush2.msra.mxu0 0.0
    %127 = vmatprep.subr.mxu0 0.0
    %128 = vmatpush2.msra.mxu0 0.0
    %129 = vmatprep.subr.mxu0 0.0
    %130 = vmatpush2.msra.mxu0 0.0
    %131 = vmatprep.subr.mxu0 0.0
    %132 = vmatpush2.msra.mxu0 0.0
    %133 = vmatprep.mubr.f32.mxu0 0.0
    %134 = vmatmul.mubr.f32.gmra.mxu0 %v67
    %v135 = vpop.f32.mrf.mxu0
    %v136 = vadd.f32 0.0, %v135
    %v137 = vpop.f32.mrf.mxu0
    %138 = vdwg.mxu0
    %v139 = vld [vmem:[%s3] sm:$0xf]
    %v140 = vld [vmem:[%s3 + $0x4] sm:$0xf]
    %v141 = vld [vmem:[%s3 + $0x8] sm:$0xf]
    %v142 = vld [vmem:[%s3 + $0xc] sm:$0xf]
    %v143 = vld [vmem:[%s3 + $0x10] sm:$0xf]
    %v144 = vld [vmem:[%s3 + $0x14] sm:$0xf]
    %v145 = vunpack.c.l.bf16 %v139
    %v146 = vunpack.c.l.bf16 %v140
    %v147 = vunpack.c.l.bf16 %v141
    %v148 = vunpack.c.l.bf16 %v142
    %v149 = vunpack.c.l.bf16 %v143
    %v150 = vunpack.c.l.bf16 %v144
    %v151 = vld [vmem:[#allocation2 + $0x21] ss:$0 sm:$0xff]
    %vm152 = vcmask 392192
    %v154 = vsel %vm152, %v136, 0
    %156 = vmatprep.subr.mxu0 0.0
    %157 = vmatpush1.msra.mxu0 0.0
    %158 = vmatprep.subr.mxu0 0.0
    %159 = vmatpush1.msra.mxu0 0.0
    %160 = vmatprep.subr.mxu0 0.0
    %161 = vmatpush1.msra.mxu0 0.0
    %162 = vmatprep.subr.mxu0 0.0
    %163 = vmatpush1.msra.mxu0 0.0
    %164 = vmatprep.subr.mxu0 0.0
    %165 = vmatpush1.msra.mxu0 0.0
    %166 = vmatprep.subr.mxu0 0.0
    %167 = vmatpush1.msra.mxu0 0.0
    %168 = vmatprep.subr.mxu0 0.0
    %169 = vmatpush1.msra.mxu0 0.0
    %170 = vmatprep.subr.mxu0 0.0
    %171 = vmatpush1.msra.mxu0 0.0
    %172 = vmatprep.subr.mxu0 0.0
    %173 = vmatpush1.msra.mxu0 0.0
    %174 = vmatprep.subr.mxu0 0.0
    %175 = vmatpush1.msra.mxu0 0.0
    %176 = vmatprep.subr.mxu0 0.0
    %177 = vmatpush1.msra.mxu0 %v150
    %178 = vmatprep.subr.mxu0 0.0
    %179 = vmatpush1.msra.mxu0 %v149
    %180 = vmatprep.subr.mxu0 0.0
    %181 = vmatpush1.msra.mxu0 %v148
    %182 = vmatprep.subr.mxu0 0.0
    %183 = vmatpush1.msra.mxu0 %v147
    %184 = vmatprep.subr.mxu0 0.0
    %185 = vmatpush1.msra.mxu0 %v146
    %186 = vmatprep.subr.mxu0 0.0
    %187 = vmatpush1.msra.mxu0 %v145
    %188 = vmatprep.subr.mxu0 0.0
    %189 = vmatpush2.msra.mxu0 0.0
    %190 = vmatprep.subr.mxu0 0.0
    %191 = vmatpush2.msra.mxu0 0.0
    %192 = vmatprep.subr.mxu0 0.0
    %193 = vmatpush2.msra.mxu0 0.0
    %194 = vmatprep.subr.mxu0 0.0
    %195 = vmatpush2.msra.mxu0 0.0
    %196 = vmatprep.subr.mxu0 0.0
    %197 = vmatpush2.msra.mxu0 0.0
    %198 = vmatprep.subr.mxu0 0.0
    %199 = vmatpush2.msra.mxu0 0.0
    %200 = vmatprep.subr.mxu0 0.0
    %201 = vmatpush2.msra.mxu0 0.0
    %202 = vmatprep.subr.mxu0 0.0
    %203 = vmatpush2.msra.mxu0 0.0
    %204 = vmatprep.subr.mxu0 0.0
    %205 = vmatpush2.msra.mxu0 0.0
    %206 = vmatprep.subr.mxu0 0.0
    %207 = vmatpush2.msra.mxu0 0.0
    %208 = vmatprep.subr.mxu0 0.0
    %209 = vmatpush2.msra.mxu0 0.0
    %210 = vmatprep.subr.mxu0 0.0
    %211 = vmatpush2.msra.mxu0 0.0
    %212 = vmatprep.subr.mxu0 0.0
    %213 = vmatpush2.msra.mxu0 0.0
    %214 = vmatprep.subr.mxu0 0.0
    %215 = vmatpush2.msra.mxu0 0.0
    %216 = vmatprep.subr.mxu0 0.0
    %217 = vmatpush2.msra.mxu0 0.0
    %218 = vmatprep.subr.mxu0 0.0
    %219 = vmatpush2.msra.mxu0 0.0
    %220 = vmatprep.mubr.f32.mxu0 0.0
    %221 = vmatmul.mubr.f32.gmra.mxu0 %v154
    %v222 = vpop.f32.mrf.mxu0
    %v223 = vadd.f32 %v151, %v222
    %v224 = vpop.f32.mrf.mxu0
    %225 = vdwg.mxu0
    %v226 = vmax.f32 %v223, 0.0
    %v227 = vld [vmem:[%s3 + $0x18] sm:$0xf]
    %v228 = vld [vmem:[%s3 + $0x1c] sm:$0xf]
    %v229 = vld [vmem:[%s3 + $0x20] sm:$0xf]
    %v230 = vld [vmem:[%s3 + $0x24] sm:$0xf]
    %v231 = vunpack.c.l.bf16 %v227
    %v232 = vunpack.c.l.bf16 %v228
    %v233 = vunpack.c.l.bf16 %v229
    %v234 = vunpack.c.l.bf16 %v230
    %v235 = vld [vmem:[#allocation2 + $0x22] ss:$0 sm:$0xff]
    %vm236 = vcmask 261120
    %v238 = vsel %vm236, %v226, 0
    %240 = vmatprep.subr.mxu0 0.0
    %241 = vmatpush1.msra.mxu0 0.0
    %242 = vmatprep.subr.mxu0 0.0
    %243 = vmatpush1.msra.mxu0 0.0
    %244 = vmatprep.subr.mxu0 0.0
    %245 = vmatpush1.msra.mxu0 0.0
    %246 = vmatprep.subr.mxu0 0.0
    %247 = vmatpush1.msra.mxu0 0.0
    %248 = vmatprep.subr.mxu0 0.0
    %249 = vmatpush1.msra.mxu0 0.0
    %250 = vmatprep.subr.mxu0 0.0
    %251 = vmatpush1.msra.mxu0 0.0
    %252 = vmatprep.subr.mxu0 0.0
    %253 = vmatpush1.msra.mxu0 0.0
    %254 = vmatprep.subr.mxu0 0.0
    %255 = vmatpush1.msra.mxu0 0.0
    %256 = vmatprep.subr.mxu0 0.0
    %257 = vmatpush1.msra.mxu0 0.0
    %258 = vmatprep.subr.mxu0 0.0
    %259 = vmatpush1.msra.mxu0 0.0
    %260 = vmatprep.subr.mxu0 0.0
    %261 = vmatpush1.msra.mxu0 0.0
    %262 = vmatprep.subr.mxu0 0.0
    %263 = vmatpush1.msra.mxu0 0.0
    %264 = vmatprep.subr.mxu0 0.0
    %265 = vmatpush1.msra.mxu0 %v234
    %266 = vmatprep.subr.mxu0 0.0
    %267 = vmatpush1.msra.mxu0 %v233
    %268 = vmatprep.subr.mxu0 0.0
    %269 = vmatpush1.msra.mxu0 %v232
    %270 = vmatprep.subr.mxu0 0.0
    %271 = vmatpush1.msra.mxu0 %v231
    %272 = vmatprep.subr.mxu0 0.0
    %273 = vmatpush2.msra.mxu0 0.0
    %274 = vmatprep.subr.mxu0 0.0
    %275 = vmatpush2.msra.mxu0 0.0
    %276 = vmatprep.subr.mxu0 0.0
    %277 = vmatpush2.msra.mxu0 0.0
    %278 = vmatprep.subr.mxu0 0.0
    %279 = vmatpush2.msra.mxu0 0.0
    %280 = vmatprep.subr.mxu0 0.0
    %281 = vmatpush2.msra.mxu0 0.0
    %282 = vmatprep.subr.mxu0 0.0
    %283 = vmatpush2.msra.mxu0 0.0
    %284 = vmatprep.subr.mxu0 0.0
    %285 = vmatpush2.msra.mxu0 0.0
    %286 = vmatprep.subr.mxu0 0.0
    %287 = vmatpush2.msra.mxu0 0.0
    %288 = vmatprep.subr.mxu0 0.0
    %289 = vmatpush2.msra.mxu0 0.0
    %290 = vmatprep.subr.mxu0 0.0
    %291 = vmatpush2.msra.mxu0 0.0
    %292 = vmatprep.subr.mxu0 0.0
    %293 = vmatpush2.msra.mxu0 0.0
    %294 = vmatprep.subr.mxu0 0.0
    %295 = vmatpush2.msra.mxu0 0.0
    %296 = vmatprep.subr.mxu0 0.0
    %297 = vmatpush2.msra.mxu0 0.0
    %298 = vmatprep.subr.mxu0 0.0
    %299 = vmatpush2.msra.mxu0 0.0
    %300 = vmatprep.subr.mxu0 0.0
    %301 = vmatpush2.msra.mxu0 0.0
    %302 = vmatprep.subr.mxu0 0.0
    %303 = vmatpush2.msra.mxu0 0.0
    %304 = vmatprep.mubr.f32.mxu0 0.0
    %305 = vmatmul.mubr.f32.gmra.mxu0 %v238
    %v306 = vpop.f32.mrf.mxu0
    %v307 = vadd.f32 %v235, %v306
    %v308 = vpop.f32.mrf.mxu0
    %309 = vdwg.mxu0
    %v310 = vmax.f32 %v307, 0.0
    %v311 = vld [vmem:[%s3 + $0x28] sm:$0xf]
    %v312 = vld [vmem:[%s3 + $0x2c] sm:$0xf]
    %v313 = vld [vmem:[%s3 + $0x30] sm:$0xf]
    %v314 = vld [vmem:[%s3 + $0x34] sm:$0xf]
    %v315 = vunpack.c.l.bf16 %v311
    %v316 = vunpack.c.l.bf16 %v312
    %v317 = vunpack.c.l.bf16 %v313
    %v318 = vunpack.c.l.bf16 %v314
    %v319 = vld [vmem:[#allocation2 + $0x23] ss:$0 sm:$0xff]
    %v321 = vsel %vm236, %v310, 0
    %323 = vmatprep.subr.mxu0 0.0
    %324 = vmatpush1.msra.mxu0 0.0
    %325 = vmatprep.subr.mxu0 0.0
    %326 = vmatpush1.msra.mxu0 0.0
    %327 = vmatprep.subr.mxu0 0.0
    %328 = vmatpush1.msra.mxu0 0.0
    %329 = vmatprep.subr.mxu0 0.0
    %330 = vmatpush1.msra.mxu0 0.0
    %331 = vmatprep.subr.mxu0 0.0
    %332 = vmatpush1.msra.mxu0 0.0
    %333 = vmatprep.subr.mxu0 0.0
    %334 = vmatpush1.msra.mxu0 0.0
    %335 = vmatprep.subr.mxu0 0.0
    %336 = vmatpush1.msra.mxu0 0.0
    %337 = vmatprep.subr.mxu0 0.0
    %338 = vmatpush1.msra.mxu0 0.0
    %339 = vmatprep.subr.mxu0 0.0
    %340 = vmatpush1.msra.mxu0 0.0
    %341 = vmatprep.subr.mxu0 0.0
    %342 = vmatpush1.msra.mxu0 0.0
    %343 = vmatprep.subr.mxu0 0.0
    %344 = vmatpush1.msra.mxu0 0.0
    %345 = vmatprep.subr.mxu0 0.0
    %346 = vmatpush1.msra.mxu0 0.0
    %347 = vmatprep.subr.mxu0 0.0
    %348 = vmatpush1.msra.mxu0 %v318
    %349 = vmatprep.subr.mxu0 0.0
    %350 = vmatpush1.msra.mxu0 %v317
    %351 = vmatprep.subr.mxu0 0.0
    %352 = vmatpush1.msra.mxu0 %v316
    %353 = vmatprep.subr.mxu0 0.0
    %354 = vmatpush1.msra.mxu0 %v315
    %355 = vmatprep.subr.mxu0 0.0
    %356 = vmatpush2.msra.mxu0 0.0
    %357 = vmatprep.subr.mxu0 0.0
    %358 = vmatpush2.msra.mxu0 0.0
    %359 = vmatprep.subr.mxu0 0.0
    %360 = vmatpush2.msra.mxu0 0.0
    %361 = vmatprep.subr.mxu0 0.0
    %362 = vmatpush2.msra.mxu0 0.0
    %363 = vmatprep.subr.mxu0 0.0
    %364 = vmatpush2.msra.mxu0 0.0
    %365 = vmatprep.subr.mxu0 0.0
    %366 = vmatpush2.msra.mxu0 0.0
    %367 = vmatprep.subr.mxu0 0.0
    %368 = vmatpush2.msra.mxu0 0.0
    %369 = vmatprep.subr.mxu0 0.0
    %370 = vmatpush2.msra.mxu0 0.0
    %371 = vmatprep.subr.mxu0 0.0
    %372 = vmatpush2.msra.mxu0 0.0
    %373 = vmatprep.subr.mxu0 0.0
    %374 = vmatpush2.msra.mxu0 0.0
    %375 = vmatprep.subr.mxu0 0.0
    %376 = vmatpush2.msra.mxu0 0.0
    %377 = vmatprep.subr.mxu0 0.0
    %378 = vmatpush2.msra.mxu0 0.0
    %379 = vmatprep.subr.mxu0 0.0
    %380 = vmatpush2.msra.mxu0 0.0
    %381 = vmatprep.subr.mxu0 0.0
    %382 = vmatpush2.msra.mxu0 0.0
    %383 = vmatprep.subr.mxu0 0.0
    %384 = vmatpush2.msra.mxu0 0.0
    %385 = vmatprep.subr.mxu0 0.0
    %386 = vmatpush2.msra.mxu0 0.0
    %387 = vmatprep.mubr.f32.mxu0 0.0
    %388 = vmatmul.mubr.f32.gmra.mxu0 %v321
    %v389 = vpop.f32.mrf.mxu0
    %v390 = vadd.f32 %v319, %v389
    %v391 = vpop.f32.mrf.mxu0
    %392 = vdwg.mxu0
    %v393 = vld [vmem:[%s1] sm:$0xff]
    %v394 = vmul.f32 %v390, 0.5
    %v395 = vmul.f32 %v394, 1.442695
    %v396 = vpow.pop %v395
    %398 = vrot.lane.b32.xlu0 %v396, 120
    %v399 = vpop.permute.xlu0 %398
    %v401 = vmul.f32 %v393, %v399
    %v402 = vadd.f32 %v390, %v401
    %v403 = vld [vmem:[#allocation2] sm:$0xff]
    %v404 = vld [vmem:[#allocation2 + $0x8] sm:$0xff]
    %v405 = vld [vmem:[#allocation2 + $0x10] sm:$0xff]
    %v406 = vld [vmem:[#allocation2 + $0x18] sm:$0xff]
    %s407 = scalar_lea.vmem [#allocation2], 32
    %v408 = vld [vmem:[%s407] ss:$8 sm:$0xf]
    %v410 = vlaneseq
    %v411 = vshrl.u32 %v410, 7
    %v412 = vsub.s32 0, %v411
    %v413 = vrot.slane %v408, %v412
    %v414 = vlaneseq
    %v415 = vshrl.u32 %v414, 7
    %v416 = vsub.s32 1, %v415
    %v417 = vrot.slane %v408, %v416
    %v418 = vlaneseq
    %v419 = vshrl.u32 %v418, 7
    %v420 = vsub.s32 2, %v419
    %v421 = vrot.slane %v408, %v420
    %v422 = vlaneseq
    %v423 = vshrl.u32 %v422, 7
    %v424 = vsub.s32 3, %v423
    %v425 = vrot.slane %v408, %v424
    %vm430 = vcmask 64512
    %v432 = vsel %vm430, %v402, 0
    %434 = vmatprep.subr.mxu0 0.0
    %435 = vmatpush1.msra.mxu0 0.0
    %436 = vmatprep.subr.mxu0 0.0
    %437 = vmatpush1.msra.mxu0 0.0
    %438 = vmatprep.subr.mxu0 0.0
    %439 = vmatpush1.msra.mxu0 0.0
    %440 = vmatprep.subr.mxu0 0.0
    %441 = vmatpush1.msra.mxu0 0.0
    %442 = vmatprep.subr.mxu0 0.0
    %443 = vmatpush1.msra.mxu0 0.0
    %444 = vmatprep.subr.mxu0 0.0
    %445 = vmatpush1.msra.mxu0 0.0
    %446 = vmatprep.subr.mxu0 0.0
    %447 = vmatpush1.msra.mxu0 0.0
    %448 = vmatprep.subr.mxu0 0.0
    %449 = vmatpush1.msra.mxu0 0.0
    %450 = vmatprep.subr.mxu0 0.0
    %451 = vmatpush1.msra.mxu0 0.0
    %452 = vmatprep.subr.mxu0 0.0
    %453 = vmatpush1.msra.mxu0 0.0
    %454 = vmatprep.subr.mxu0 0.0
    %455 = vmatpush1.msra.mxu0 0.0
    %456 = vmatprep.subr.mxu0 0.0
    %457 = vmatpush1.msra.mxu0 0.0
    %458 = vmatprep.subr.mxu0 0.0
    %459 = vmatpush1.msra.mxu0 0.0
    %460 = vmatprep.subr.mxu0 0.0
    %461 = vmatpush1.msra.mxu0 0.0
    %462 = vmatprep.subr.mxu0 0.0
    %463 = vmatpush1.msra.mxu0 0.0
    %464 = vmatprep.subr.mxu0 %v404
    %465 = vmatpush1.msra.mxu0 %v403
    %466 = vmatprep.subr.mxu0 0.0
    %467 = vmatpush2.msra.mxu0 0.0
    %468 = vmatprep.subr.mxu0 0.0
    %469 = vmatpush2.msra.mxu0 0.0
    %470 = vmatprep.subr.mxu0 0.0
    %471 = vmatpush2.msra.mxu0 0.0
    %472 = vmatprep.subr.mxu0 0.0
    %473 = vmatpush2.msra.mxu0 0.0
    %474 = vmatprep.subr.mxu0 0.0
    %475 = vmatpush2.msra.mxu0 0.0
    %476 = vmatprep.subr.mxu0 0.0
    %477 = vmatpush2.msra.mxu0 0.0
    %478 = vmatprep.subr.mxu0 0.0
    %479 = vmatpush2.msra.mxu0 0.0
    %480 = vmatprep.subr.mxu0 0.0
    %481 = vmatpush2.msra.mxu0 0.0
    %482 = vmatprep.subr.mxu0 0.0
    %483 = vmatpush2.msra.mxu0 0.0
    %484 = vmatprep.subr.mxu0 0.0
    %485 = vmatpush2.msra.mxu0 0.0
    %486 = vmatprep.subr.mxu0 0.0
    %487 = vmatpush2.msra.mxu0 0.0
    %488 = vmatprep.subr.mxu0 0.0
    %489 = vmatpush2.msra.mxu0 0.0
    %490 = vmatprep.subr.mxu0 0.0
    %491 = vmatpush2.msra.mxu0 0.0
    %492 = vmatprep.subr.mxu0 0.0
    %493 = vmatpush2.msra.mxu0 0.0
    %494 = vmatprep.subr.mxu0 0.0
    %495 = vmatpush2.msra.mxu0 0.0
    %496 = vmatprep.subr.mxu0 0.0
    %497 = vmatpush2.msra.mxu0 0.0
    %498 = vmatprep.mubr.f32.mxu0 0.0
    %499 = vmatmul.mubr.f32.gmra.mxu0 %v432
    %v500 = vpop.f32.mrf.mxu0
    %v501 = vadd.f32 %v413, %v500
    %v502 = vpop.f32.mrf.mxu0
    %v503 = vadd.f32 %v417, %v502
    %504 = vdwg.mxu0
    %505 = vmatprep.subr.mxu0 0.0
    %506 = vmatpush1.msra.mxu0 0.0
    %507 = vmatprep.subr.mxu0 0.0
    %508 = vmatpush1.msra.mxu0 0.0
    %509 = vmatprep.subr.mxu0 0.0
    %510 = vmatpush1.msra.mxu0 0.0
    %511 = vmatprep.subr.mxu0 0.0
    %512 = vmatpush1.msra.mxu0 0.0
    %513 = vmatprep.subr.mxu0 0.0
    %514 = vmatpush1.msra.mxu0 0.0
    %515 = vmatprep.subr.mxu0 0.0
    %516 = vmatpush1.msra.mxu0 0.0
    %517 = vmatprep.subr.mxu0 0.0
    %518 = vmatpush1.msra.mxu0 0.0
    %519 = vmatprep.subr.mxu0 0.0
    %520 = vmatpush1.msra.mxu0 0.0
    %521 = vmatprep.subr.mxu0 0.0
    %522 = vmatpush1.msra.mxu0 0.0
    %523 = vmatprep.subr.mxu0 0.0
    %524 = vmatpush1.msra.mxu0 0.0
    %525 = vmatprep.subr.mxu0 0.0
    %526 = vmatpush1.msra.mxu0 0.0
    %527 = vmatprep.subr.mxu0 0.0
    %528 = vmatpush1.msra.mxu0 0.0
    %529 = vmatprep.subr.mxu0 0.0
    %530 = vmatpush1.msra.mxu0 0.0
    %531 = vmatprep.subr.mxu0 0.0
    %532 = vmatpush1.msra.mxu0 0.0
    %533 = vmatprep.subr.mxu0 0.0
    %534 = vmatpush1.msra.mxu0 0.0
    %535 = vmatprep.subr.mxu0 %v406
    %536 = vmatpush1.msra.mxu0 %v405
    %537 = vmatprep.subr.mxu0 0.0
    %538 = vmatpush2.msra.mxu0 0.0
    %539 = vmatprep.subr.mxu0 0.0
    %540 = vmatpush2.msra.mxu0 0.0
    %541 = vmatprep.subr.mxu0 0.0
    %542 = vmatpush2.msra.mxu0 0.0
    %543 = vmatprep.subr.mxu0 0.0
    %544 = vmatpush2.msra.mxu0 0.0
    %545 = vmatprep.subr.mxu0 0.0
    %546 = vmatpush2.msra.mxu0 0.0
    %547 = vmatprep.subr.mxu0 0.0
    %548 = vmatpush2.msra.mxu0 0.0
    %549 = vmatprep.subr.mxu0 0.0
    %550 = vmatpush2.msra.mxu0 0.0
    %551 = vmatprep.subr.mxu0 0.0
    %552 = vmatpush2.msra.mxu0 0.0
    %553 = vmatprep.subr.mxu0 0.0
    %554 = vmatpush2.msra.mxu0 0.0
    %555 = vmatprep.subr.mxu0 0.0
    %556 = vmatpush2.msra.mxu0 0.0
    %557 = vmatprep.subr.mxu0 0.0
    %558 = vmatpush2.msra.mxu0 0.0
    %559 = vmatprep.subr.mxu0 0.0
    %560 = vmatpush2.msra.mxu0 0.0
    %561 = vmatprep.subr.mxu0 0.0
    %562 = vmatpush2.msra.mxu0 0.0
    %563 = vmatprep.subr.mxu0 0.0
    %564 = vmatpush2.msra.mxu0 0.0
    %565 = vmatprep.subr.mxu0 0.0
    %566 = vmatpush2.msra.mxu0 0.0
    %567 = vmatprep.subr.mxu0 0.0
    %568 = vmatpush2.msra.mxu0 0.0
    %569 = vmatprep.mubr.f32.mxu0 0.0
    %570 = vmatmul.mubr.f32.gmra.mxu0 %v432
    %v571 = vpop.f32.mrf.mxu0
    %v572 = vadd.f32 %v421, %v571
    %v573 = vpop.f32.mrf.mxu0
    %v574 = vadd.f32 %v425, %v573
    %575 = vdwg.mxu0
    %v576 = vmax.f32 %v501, 0.0
    %v577 = vld [vmem:[%s3 + $0x38] sm:$0xf]
    %v578 = vld [vmem:[%s3 + $0x3c] sm:$0xf]
    %v579 = vld [vmem:[%s3 + $0x40] sm:$0xf]
    %v580 = vld [vmem:[%s3 + $0x44] sm:$0xf]
    %v581 = vunpack.c.l.bf16 %v577
    %v582 = vunpack.c.l.bf16 %v578
    %v583 = vunpack.c.l.bf16 %v579
    %v584 = vunpack.c.l.bf16 %v580
    %v585 = vld [vmem:[#allocation2 + $0x24] ss:$0 sm:$0xff]
    %v587 = vsel %vm236, %v576, 0
    %589 = vmatprep.subr.mxu0 0.0
    %590 = vmatpush1.msra.mxu0 0.0
    %591 = vmatprep.subr.mxu0 0.0
    %592 = vmatpush1.msra.mxu0 0.0
    %593 = vmatprep.subr.mxu0 0.0
    %594 = vmatpush1.msra.mxu0 0.0
    %595 = vmatprep.subr.mxu0 0.0
    %596 = vmatpush1.msra.mxu0 0.0
    %597 = vmatprep.subr.mxu0 0.0
    %598 = vmatpush1.msra.mxu0 0.0
    %599 = vmatprep.subr.mxu0 0.0
    %600 = vmatpush1.msra.mxu0 0.0
    %601 = vmatprep.subr.mxu0 0.0
    %602 = vmatpush1.msra.mxu0 0.0
    %603 = vmatprep.subr.mxu0 0.0
    %604 = vmatpush1.msra.mxu0 0.0
    %605 = vmatprep.subr.mxu0 0.0
    %606 = vmatpush1.msra.mxu0 0.0
    %607 = vmatprep.subr.mxu0 0.0
    %608 = vmatpush1.msra.mxu0 0.0
    %609 = vmatprep.subr.mxu0 0.0
    %610 = vmatpush1.msra.mxu0 0.0
    %611 = vmatprep.subr.mxu0 0.0
    %612 = vmatpush1.msra.mxu0 0.0
    %613 = vmatprep.subr.mxu0 0.0
    %614 = vmatpush1.msra.mxu0 %v584
    %615 = vmatprep.subr.mxu0 0.0
    %616 = vmatpush1.msra.mxu0 %v583
    %617 = vmatprep.subr.mxu0 0.0
    %618 = vmatpush1.msra.mxu0 %v582
    %619 = vmatprep.subr.mxu0 0.0
    %620 = vmatpush1.msra.mxu0 %v581
    %621 = vmatprep.subr.mxu0 0.0
    %622 = vmatpush2.msra.mxu0 0.0
    %623 = vmatprep.subr.mxu0 0.0
    %624 = vmatpush2.msra.mxu0 0.0
    %625 = vmatprep.subr.mxu0 0.0
    %626 = vmatpush2.msra.mxu0 0.0
    %627 = vmatprep.subr.mxu0 0.0
    %628 = vmatpush2.msra.mxu0 0.0
    %629 = vmatprep.subr.mxu0 0.0
    %630 = vmatpush2.msra.mxu0 0.0
    %631 = vmatprep.subr.mxu0 0.0
    %632 = vmatpush2.msra.mxu0 0.0
    %633 = vmatprep.subr.mxu0 0.0
    %634 = vmatpush2.msra.mxu0 0.0
    %635 = vmatprep.subr.mxu0 0.0
    %636 = vmatpush2.msra.mxu0 0.0
    %637 = vmatprep.subr.mxu0 0.0
    %638 = vmatpush2.msra.mxu0 0.0
    %639 = vmatprep.subr.mxu0 0.0
    %640 = vmatpush2.msra.mxu0 0.0
    %641 = vmatprep.subr.mxu0 0.0
    %642 = vmatpush2.msra.mxu0 0.0
    %643 = vmatprep.subr.mxu0 0.0
    %644 = vmatpush2.msra.mxu0 0.0
    %645 = vmatprep.subr.mxu0 0.0
    %646 = vmatpush2.msra.mxu0 0.0
    %647 = vmatprep.subr.mxu0 0.0
    %648 = vmatpush2.msra.mxu0 0.0
    %649 = vmatprep.subr.mxu0 0.0
    %650 = vmatpush2.msra.mxu0 0.0
    %651 = vmatprep.subr.mxu0 0.0
    %652 = vmatpush2.msra.mxu0 0.0
    %653 = vmatprep.mubr.f32.mxu0 0.0
    %654 = vmatmul.mubr.f32.gmra.mxu0 %v587
    %v655 = vpop.f32.mrf.mxu0
    %v656 = vadd.f32 %v585, %v655
    %v657 = vpop.f32.mrf.mxu0
    %658 = vdwg.mxu0
    %v659 = vmax.f32 %v656, 0.0
    %v660 = vld [vmem:[%s3 + $0x48] sm:$0xf]
    %v661 = vld [vmem:[%s3 + $0x4c] sm:$0xf]
    %v662 = vld [vmem:[%s3 + $0x50] sm:$0xf]
    %v663 = vld [vmem:[%s3 + $0x54] sm:$0xf]
    %v664 = vunpack.c.l.bf16 %v660
    %v665 = vunpack.c.l.bf16 %v661
    %v666 = vunpack.c.l.bf16 %v662
    %v667 = vunpack.c.l.bf16 %v663
    %v668 = vld [vmem:[#allocation2 + $0x25] ss:$0 sm:$0xff]
    %v670 = vsel %vm236, %v659, 0
    %672 = vmatprep.subr.mxu0 0.0
    %673 = vmatpush1.msra.mxu0 0.0
    %674 = vmatprep.subr.mxu0 0.0
    %675 = vmatpush1.msra.mxu0 0.0
    %676 = vmatprep.subr.mxu0 0.0
    %677 = vmatpush1.msra.mxu0 0.0
    %678 = vmatprep.subr.mxu0 0.0
    %679 = vmatpush1.msra.mxu0 0.0
    %680 = vmatprep.subr.mxu0 0.0
    %681 = vmatpush1.msra.mxu0 0.0
    %682 = vmatprep.subr.mxu0 0.0
    %683 = vmatpush1.msra.mxu0 0.0
    %684 = vmatprep.subr.mxu0 0.0
    %685 = vmatpush1.msra.mxu0 0.0
    %686 = vmatprep.subr.mxu0 0.0
    %687 = vmatpush1.msra.mxu0 0.0
    %688 = vmatprep.subr.mxu0 0.0
    %689 = vmatpush1.msra.mxu0 0.0
    %690 = vmatprep.subr.mxu0 0.0
    %691 = vmatpush1.msra.mxu0 0.0
    %692 = vmatprep.subr.mxu0 0.0
    %693 = vmatpush1.msra.mxu0 0.0
    %694 = vmatprep.subr.mxu0 0.0
    %695 = vmatpush1.msra.mxu0 0.0
    %696 = vmatprep.subr.mxu0 0.0
    %697 = vmatpush1.msra.mxu0 %v667
    %698 = vmatprep.subr.mxu0 0.0
    %699 = vmatpush1.msra.mxu0 %v666
    %700 = vmatprep.subr.mxu0 0.0
    %701 = vmatpush1.msra.mxu0 %v665
    %702 = vmatprep.subr.mxu0 0.0
    %703 = vmatpush1.msra.mxu0 %v664
    %704 = vmatprep.subr.mxu0 0.0
    %705 = vmatpush2.msra.mxu0 0.0
    %706 = vmatprep.subr.mxu0 0.0
    %707 = vmatpush2.msra.mxu0 0.0
    %708 = vmatprep.subr.mxu0 0.0
    %709 = vmatpush2.msra.mxu0 0.0
    %710 = vmatprep.subr.mxu0 0.0
    %711 = vmatpush2.msra.mxu0 0.0
    %712 = vmatprep.subr.mxu0 0.0
    %713 = vmatpush2.msra.mxu0 0.0
    %714 = vmatprep.subr.mxu0 0.0
    %715 = vmatpush2.msra.mxu0 0.0
    %716 = vmatprep.subr.mxu0 0.0
    %717 = vmatpush2.msra.mxu0 0.0
    %718 = vmatprep.subr.mxu0 0.0
    %719 = vmatpush2.msra.mxu0 0.0
    %720 = vmatprep.subr.mxu0 0.0
    %721 = vmatpush2.msra.mxu0 0.0
    %722 = vmatprep.subr.mxu0 0.0
    %723 = vmatpush2.msra.mxu0 0.0
    %724 = vmatprep.subr.mxu0 0.0
    %725 = vmatpush2.msra.mxu0 0.0
    %726 = vmatprep.subr.mxu0 0.0
    %727 = vmatpush2.msra.mxu0 0.0
    %728 = vmatprep.subr.mxu0 0.0
    %729 = vmatpush2.msra.mxu0 0.0
    %730 = vmatprep.subr.mxu0 0.0
    %731 = vmatpush2.msra.mxu0 0.0
    %732 = vmatprep.subr.mxu0 0.0
    %733 = vmatpush2.msra.mxu0 0.0
    %734 = vmatprep.subr.mxu0 0.0
    %735 = vmatpush2.msra.mxu0 0.0
    %736 = vmatprep.mubr.f32.mxu0 0.0
    %737 = vmatmul.mubr.f32.gmra.mxu0 %v670
    %v738 = vpop.f32.mrf.mxu0
    %v739 = vadd.f32 %v668, %v738
    %v740 = vpop.f32.mrf.mxu0
    %741 = vdwg.mxu0
    %v742 = vmax.f32 %v739, 0.0
    %v743 = vld [vmem:[%s3 + $0x58] sm:$0xf]
    %v744 = vld [vmem:[%s3 + $0x5c] sm:$0xf]
    %v745 = vld [vmem:[%s3 + $0x60] sm:$0xf]
    %v746 = vld [vmem:[%s3 + $0x64] sm:$0xf]
    %v747 = vld [vmem:[%s3 + $0x68] sm:$0xf]
    %v748 = vld [vmem:[%s3 + $0x6c] sm:$0xf]
    %v749 = vld [vmem:[%s3 + $0x70] sm:$0xf]
    %v750 = vld [vmem:[%s3 + $0x74] sm:$0xf]
    %v751 = vld [vmem:[%s3 + $0x78] sm:$0xf]
    %v752 = vld [vmem:[%s3 + $0x7c] sm:$0xf]
    %v753 = vld [vmem:[%s3 + $0x80] sm:$0xf]
    %v754 = vld [vmem:[%s3 + $0x84] sm:$0xf]
    %v755 = vld [vmem:[%s3 + $0x88] sm:$0xf]
    %v756 = vld [vmem:[%s3 + $0x8c] sm:$0xf]
    %v757 = vld [vmem:[%s3 + $0x90] sm:$0xf]
    %v758 = vld [vmem:[%s3 + $0x94] sm:$0xf]
    %v759 = vld [vmem:[%s3 + $0x98] sm:$0xf]
    %v760 = vld [vmem:[%s3 + $0x9c] sm:$0xf]
    %v761 = vld [vmem:[%s3 + $0xa0] sm:$0xf]
    %v762 = vld [vmem:[%s3 + $0xa4] sm:$0xf]
    %v763 = vld [vmem:[%s3 + $0xa8] sm:$0xf]
    %v764 = vld [vmem:[%s3 + $0xac] sm:$0xf]
    %v765 = vld [vmem:[%s3 + $0xb0] sm:$0xf]
    %v766 = vld [vmem:[%s3 + $0xb4] sm:$0xf]
    %v767 = vld [vmem:[%s3 + $0xb8] sm:$0xf]
    %v768 = vld [vmem:[%s3 + $0xbc] sm:$0xf]
    %v769 = vld [vmem:[%s3 + $0xc0] sm:$0xf]
    %v770 = vld [vmem:[%s3 + $0xc4] sm:$0xf]
    %v771 = vld [vmem:[%s3 + $0xc8] sm:$0xf]
    %v772 = vld [vmem:[%s3 + $0xcc] sm:$0xf]
    %v773 = vld [vmem:[%s3 + $0xd0] sm:$0xf]
    %v774 = vld [vmem:[%s3 + $0xd4] sm:$0xf]
    %v775 = vld [vmem:[%s3 + $0xd8] sm:$0xf]
    %v776 = vld [vmem:[%s3 + $0xdc] sm:$0xf]
    %v777 = vld [vmem:[%s3 + $0xe0] sm:$0xf]
    %v778 = vld [vmem:[%s3 + $0xe4] sm:$0xf]
    %v779 = vunpack.c.l.bf16 %v743
    %v780 = vunpack.c.l.bf16 %v744
    %v781 = vunpack.c.l.bf16 %v745
    %v782 = vunpack.c.l.bf16 %v746
    %v783 = vunpack.c.l.bf16 %v747
    %v784 = vunpack.c.l.bf16 %v748
    %v785 = vunpack.c.l.bf16 %v749
    %v786 = vunpack.c.l.bf16 %v750
    %v787 = vunpack.c.l.bf16 %v751
    %v788 = vunpack.c.l.bf16 %v752
    %v789 = vunpack.c.l.bf16 %v753
    %v790 = vunpack.c.l.bf16 %v754
    %v791 = vunpack.c.l.bf16 %v755
    %v792 = vunpack.c.l.bf16 %v756
    %v793 = vunpack.c.l.bf16 %v757
    %v794 = vunpack.c.l.bf16 %v758
    %v795 = vunpack.c.l.bf16 %v759
    %v796 = vunpack.c.l.bf16 %v760
    %v797 = vunpack.c.l.bf16 %v761
    %v798 = vunpack.c.l.bf16 %v762
    %v799 = vunpack.c.l.bf16 %v763
    %v800 = vunpack.c.l.bf16 %v764
    %v801 = vunpack.c.l.bf16 %v765
    %v802 = vunpack.c.l.bf16 %v766
    %v803 = vunpack.c.l.bf16 %v767
    %v804 = vunpack.c.l.bf16 %v768
    %v805 = vunpack.c.l.bf16 %v769
    %v806 = vunpack.c.l.bf16 %v770
    %v807 = vunpack.c.l.bf16 %v771
    %v808 = vunpack.c.l.bf16 %v772
    %v809 = vunpack.c.l.bf16 %v773
    %v810 = vunpack.c.l.bf16 %v774
    %v811 = vunpack.c.l.bf16 %v775
    %v812 = vunpack.c.l.bf16 %v776
    %v813 = vunpack.c.l.bf16 %v777
    %v814 = vunpack.c.l.bf16 %v778
    %v815 = vld [vmem:[#allocation2 + $0x26] ss:$0 sm:$0xff]
    %v817 = vsel %vm236, %v574, 0
    %819 = vmatprep.subr.mxu0 0.0
    %820 = vmatpush1.msra.mxu0 %v794
    %821 = vmatprep.subr.mxu0 0.0
    %822 = vmatpush1.msra.mxu0 %v793
    %823 = vmatprep.subr.mxu0 0.0
    %824 = vmatpush1.msra.mxu0 %v792
    %825 = vmatprep.subr.mxu0 0.0
    %826 = vmatpush1.msra.mxu0 %v791
    %827 = vmatprep.subr.mxu0 0.0
    %828 = vmatpush1.msra.mxu0 %v790
    %829 = vmatprep.subr.mxu0 0.0
    %830 = vmatpush1.msra.mxu0 %v789
    %831 = vmatprep.subr.mxu0 0.0
    %832 = vmatpush1.msra.mxu0 %v788
    %833 = vmatprep.subr.mxu0 0.0
    %834 = vmatpush1.msra.mxu0 %v787
    %835 = vmatprep.subr.mxu0 0.0
    %836 = vmatpush1.msra.mxu0 %v786
    %837 = vmatprep.subr.mxu0 0.0
    %838 = vmatpush1.msra.mxu0 %v785
    %839 = vmatprep.subr.mxu0 0.0
    %840 = vmatpush1.msra.mxu0 %v784
    %841 = vmatprep.subr.mxu0 0.0
    %842 = vmatpush1.msra.mxu0 %v783
    %843 = vmatprep.subr.mxu0 0.0
    %844 = vmatpush1.msra.mxu0 %v782
    %845 = vmatprep.subr.mxu0 0.0
    %846 = vmatpush1.msra.mxu0 %v781
    %847 = vmatprep.subr.mxu0 0.0
    %848 = vmatpush1.msra.mxu0 %v780
    %849 = vmatprep.subr.mxu0 0.0
    %850 = vmatpush1.msra.mxu0 %v779
    %851 = vmatprep.subr.mxu0 0.0
    %852 = vmatpush2.msra.mxu0 %v810
    %853 = vmatprep.subr.mxu0 0.0
    %854 = vmatpush2.msra.mxu0 %v809
    %855 = vmatprep.subr.mxu0 0.0
    %856 = vmatpush2.msra.mxu0 %v808
    %857 = vmatprep.subr.mxu0 0.0
    %858 = vmatpush2.msra.mxu0 %v807
    %859 = vmatprep.subr.mxu0 0.0
    %860 = vmatpush2.msra.mxu0 %v806
    %861 = vmatprep.subr.mxu0 0.0
    %862 = vmatpush2.msra.mxu0 %v805
    %863 = vmatprep.subr.mxu0 0.0
    %864 = vmatpush2.msra.mxu0 %v804
    %865 = vmatprep.subr.mxu0 0.0
    %866 = vmatpush2.msra.mxu0 %v803
    %867 = vmatprep.subr.mxu0 0.0
    %868 = vmatpush2.msra.mxu0 %v802
    %869 = vmatprep.subr.mxu0 0.0
    %870 = vmatpush2.msra.mxu0 %v801
    %871 = vmatprep.subr.mxu0 0.0
    %872 = vmatpush2.msra.mxu0 %v800
    %873 = vmatprep.subr.mxu0 0.0
    %874 = vmatpush2.msra.mxu0 %v799
    %875 = vmatprep.subr.mxu0 0.0
    %876 = vmatpush2.msra.mxu0 %v798
    %877 = vmatprep.subr.mxu0 0.0
    %878 = vmatpush2.msra.mxu0 %v797
    %879 = vmatprep.subr.mxu0 0.0
    %880 = vmatpush2.msra.mxu0 %v796
    %881 = vmatprep.subr.mxu0 0.0
    %882 = vmatpush2.msra.mxu0 %v795
    %883 = vmatprep.mubr.f32.mxu0 %v572
    %884 = vmatmul.mubr.f32.gmra.mxu0 %v503
    %v885 = vpop.f32.mrf.mxu0
    %v886 = vadd.f32 %v815, %v885
    %v887 = vpop.f32.mrf.mxu0
    %888 = vdwg.mxu0
    %889 = vmatprep.subr.mxu0 0.0
    %890 = vmatpush1.msra.mxu0 0.0
    %891 = vmatprep.subr.mxu0 0.0
    %892 = vmatpush1.msra.mxu0 0.0
    %893 = vmatprep.subr.mxu0 0.0
    %894 = vmatpush1.msra.mxu0 0.0
    %895 = vmatprep.subr.mxu0 0.0
    %896 = vmatpush1.msra.mxu0 0.0
    %897 = vmatprep.subr.mxu0 0.0
    %898 = vmatpush1.msra.mxu0 0.0
    %899 = vmatprep.subr.mxu0 0.0
    %900 = vmatpush1.msra.mxu0 0.0
    %901 = vmatprep.subr.mxu0 0.0
    %902 = vmatpush1.msra.mxu0 0.0
    %903 = vmatprep.subr.mxu0 0.0
    %904 = vmatpush1.msra.mxu0 0.0
    %905 = vmatprep.subr.mxu0 0.0
    %906 = vmatpush1.msra.mxu0 0.0
    %907 = vmatprep.subr.mxu0 0.0
    %908 = vmatpush1.msra.mxu0 0.0
    %909 = vmatprep.subr.mxu0 0.0
    %910 = vmatpush1.msra.mxu0 0.0
    %911 = vmatprep.subr.mxu0 0.0
    %912 = vmatpush1.msra.mxu0 0.0
    %913 = vmatprep.subr.mxu0 0.0
    %914 = vmatpush1.msra.mxu0 %v814
    %915 = vmatprep.subr.mxu0 0.0
    %916 = vmatpush1.msra.mxu0 %v813
    %917 = vmatprep.subr.mxu0 0.0
    %918 = vmatpush1.msra.mxu0 %v812
    %919 = vmatprep.subr.mxu0 0.0
    %920 = vmatpush1.msra.mxu0 %v811
    %921 = vmatprep.subr.mxu0 0.0
    %922 = vmatpush2.msra.mxu0 0.0
    %923 = vmatprep.subr.mxu0 0.0
    %924 = vmatpush2.msra.mxu0 0.0
    %925 = vmatprep.subr.mxu0 0.0
    %926 = vmatpush2.msra.mxu0 0.0
    %927 = vmatprep.subr.mxu0 0.0
    %928 = vmatpush2.msra.mxu0 0.0
    %929 = vmatprep.subr.mxu0 0.0
    %930 = vmatpush2.msra.mxu0 0.0
    %931 = vmatprep.subr.mxu0 0.0
    %932 = vmatpush2.msra.mxu0 0.0
    %933 = vmatprep.subr.mxu0 0.0
    %934 = vmatpush2.msra.mxu0 0.0
    %935 = vmatprep.subr.mxu0 0.0
    %936 = vmatpush2.msra.mxu0 0.0
    %937 = vmatprep.subr.mxu0 0.0
    %938 = vmatpush2.msra.mxu0 0.0
    %939 = vmatprep.subr.mxu0 0.0
    %940 = vmatpush2.msra.mxu0 0.0
    %941 = vmatprep.subr.mxu0 0.0
    %942 = vmatpush2.msra.mxu0 0.0
    %943 = vmatprep.subr.mxu0 0.0
    %944 = vmatpush2.msra.mxu0 0.0
    %945 = vmatprep.subr.mxu0 0.0
    %946 = vmatpush2.msra.mxu0 0.0
    %947 = vmatprep.subr.mxu0 0.0
    %948 = vmatpush2.msra.mxu0 0.0
    %949 = vmatprep.subr.mxu0 0.0
    %950 = vmatpush2.msra.mxu0 0.0
    %951 = vmatprep.subr.mxu0 0.0
    %952 = vmatpush2.msra.mxu0 0.0
    %953 = vmatprep.mubr.f32.mxu0 0.0
    %954 = vmatmul.mubr.f32.gmra.mxu0 %v817
    %v955 = vpop.f32.mrf.mxu0
    %v956 = vadd.f32 %v886, %v955
    %v957 = vpop.f32.mrf.mxu0
    %958 = vdwg.mxu0
    %vm959 = vcmp.lt.s32.totalorder %v36, 32
    %vm960 = vcmp.ge.s32.totalorder %v36, 32
    %vm961 = vcmp.lt.s32.totalorder %v36, 48
    %vm962 = vmand %vm960, %vm961
    %v963 = vsel %vm959, %v956, -1e+30
    %v964 = vsel %vm65, %v963, -inf
    %965 = vmax.xlane.f32.xlu0 %v964
    %v966 = vpop.xlane.xlu0 %965
    %v967 = vsel %vm962, %v956, -1e+30
    %v968 = vsel %vm65, %v967, -inf
    %969 = vmax.xlane.f32.xlu0 %v968
    %v970 = vpop.xlane.xlu0 %969
    %vm971 = vmor %vm959, %vm962
    %v972 = vsel %vm971, -1e+30, %v956
    %v973 = vsel %vm65, %v972, -inf
    %974 = vmax.xlane.f32.xlu0 %v973
    %v975 = vpop.xlane.xlu0 %974
    %v976 = vsel %vm962, %v970, %v975
    %v977 = vsel %vm959, %v966, %v976
    %v978 = vsub.f32 %v956, %v977
    %v979 = vmul.f32 %v978, 1.442695
    %v980 = vpow.pop %v979
    %v981 = vsel %vm959, %v980, 0.0
    %v982 = vsel %vm65, %v981, 0.0
    %983 = vadd.xlane.f32.xlu0 %v982
    %v984 = vpop.xlane.xlu0 %983
    %v985 = vsel %vm962, %v980, 0.0
    %v986 = vsel %vm65, %v985, 0.0
    %987 = vadd.xlane.f32.xlu0 %v986
    %v988 = vpop.xlane.xlu0 %987
    %v989 = vsel %vm971, 0.0, %v980
    %v990 = vsel %vm65, %v989, 0.0
    %991 = vadd.xlane.f32.xlu0 %v990
    %v992 = vpop.xlane.xlu0 %991
    %v993 = vsel %vm962, %v988, %v992
    %v994 = vsel %vm959, %v984, %v993
    %v995 = vrcp.pop %v994
    %v996 = vmul.f32 %v980, %v995
    %997 = vst [vmem:[%s5] sm:$0xff] 0.0
    %998 = vst [vmem:[%s5 + $0x8] sm:$0xff] 0.0
    %999 = vst [vmem:[%s5 + $0x10] sm:$0xff] 0.0
    %1000 = vst [vmem:[%s5 + $0x18] sm:$0xff] 0.0
    %1001 = vst [vmem:[%s5 + $0x20] sm:$0xff] 0.0
    %1002 = vst.msk [vmem:[%s5] sm:$0xff] %vm152, %v136
    %1003 = vst.msk [vmem:[%s5 + $0x8] sm:$0xff] %vm152, %v742
    %vm1004 = vcmask 130048
    %1005 = vst.msk [vmem:[%s5 + $0x10] sm:$0xff] %vm1004, %v390
    %1006 = vst.msk [vmem:[%s5 + $0x18] sm:$0xff] %vm65, %v956
    %1007 = vst.msk [vmem:[%s5 + $0x20] sm:$0xff] %vm65, %v996
    // Predicated region
    $region26: #{part_rot_symmetric_vae_forward.1} parent=1 // pred_check
      _
    $region27: #{part_rot_symmetric_vae_forward.1} parent=1 // pred_check_branch
      %1009 = sbr.rel (0) target = $region29
    $region28: #{part_rot_symmetric_vae_forward.1} parent=1 // pred_region
      _
    $region29: #{part_rot_symmetric_vae_forward.1} parent=1 // pred_fallthru
      _
    // Predicated region
    $region30: #{part_rot_symmetric_vae_forward.1} parent=1 // pred_check
      _
    $region31: #{part_rot_symmetric_vae_forward.1} parent=1 // pred_check_branch
      %1011 = sbr.rel (0) target = $region33
    $region32: #{part_rot_symmetric_vae_forward.1} parent=1 // pred_region
      _
    $region33: #{part_rot_symmetric_vae_forward.1} parent=1 // pred_fallthru
      _
    %1012 = vsyncpa [#allocation3], 1

</llo_original>
